<compile_context>
chip_gen: v5e
topology: v5e:2x2
jax: 0.10.0
libtpu: 0.0.40
codegen_flags: <defaults>
</compile_context>

<pallas_src>
import jax
import jax.numpy as jnp
import numpy as np
from jax.experimental import pallas as pl
from jax.experimental.pallas import tpu as pltpu

# ----- "config" (small shapes consistent with the module) -----
B = 2            # batch
BP = 8           # batch padded to a full sublane group
T = 8            # sequence length
IN_DIM = 16      # config.input_dim
HID = 32         # config.hidden_dim
OUT_DIM = 4      # config.output_dim
NUM_LAYERS = 2   # config.num_layers
H = HID

SW = 4 * H       # combined state width [h0_a|h0_b|h1_a|h1_b] = 128
GW = 16 * H      # combined gate width (4 gate types x state width) = 512
OUT_PAD = 128    # lane-padded output width

# slabA row offsets (width GW = 512)
RA_WX = 0                       # (IN_DIM, GW)  embed-folded layer-0 input weights
RA_WH = RA_WX + IN_DIM          # (SW, GW)      combined recurrent / layer-1 input weights
RA_B = RA_WH + SW               # (1, GW)       combined gate biases
SA_ROWS = RA_B + 1              # 145

# slabB row offsets (width 128)
RB_WHEAD = 0                    # (SW, 128)     fused alpha/beta head weights (h0 rows zero)
RB_BHEAD = RB_WHEAD + SW        # 128           head biases (1 row)
RB_WEMB = RB_BHEAD + 8          # 136           embed weight (IN_DIM rows, cols 0:H)
RB_WOUT = RB_WEMB + IN_DIM      # 152           output weight (H rows, cols 0:OUT_DIM)
RB_BOUT = RB_WOUT + H           # 184           output bias (1 row)
RB_PSUM = RB_BOUT + 8           # 192           time-sum selection matrix (BP rows, cols 0:T*BP)
RB_MASK = RB_PSUM + BP          # 200           layer-0 mask row [1]*2H + [0]*2H
SB_ROWS = RB_MASK + 8           # 208


def _sigmoid(x):
    # sigmoid(x) = 0.5 * (tanh(x/2) + 1): EUP tanh + VPU fma, no f32 divide.
    return 0.5 * jnp.tanh(0.5 * x) + 0.5


def _softplus(x):
    # numerically-stable softplus (matches F.softplus with beta=1)
    return jnp.maximum(x, 0.0) + jnp.log(1.0 + jnp.exp(-jnp.abs(x)))


def ua_kernel(x_ref, slabA_ref, slabB_ref, eps_ref, out_ref, hseq_ref):
    f32 = jnp.float32

    # ---- packed-parameter views (static, 8-aligned row slices) ----
    wx = slabA_ref[RA_WX:RA_WX + IN_DIM, :]            # (IN_DIM, GW)
    wh = slabA_ref[RA_WH:RA_WH + SW, :]                # (SW, GW)
    bias = slabA_ref[RA_B:RA_B + 1, :]                 # (1, GW)

    # ---- hoisted input projection for all gate columns of both layers ----
    # layer-0 columns: x @ (W_embed . W_ih0) + b0 ; layer-1 columns: b1 only.
    xproj = jnp.dot(x_ref[...], wx, preferred_element_type=f32) + bias   # ((T+1)*BP, GW)

    mask_l0 = slabB_ref[RB_MASK:RB_MASK + 1, :]        # (1, SW): ones for layer 0, zeros layer 1

    # ---- fused alpha+beta, layer-0+layer-1 wavefront recurrence: T+1 serial steps ----
    # state  [h0_a|h0_b|h1_a|h1_b]                       (BP, SW = 128)
    # gates  [i | f | o | g] each SW wide, same ordering (BP, GW = 512)
    h = jnp.zeros((BP, SW), f32)
    c = jnp.zeros((BP, SW), f32)
    for s in range(T + 1):                              # fully unrolled, 9 steps
        g = xproj[s * BP:(s + 1) * BP, :] + jnp.dot(h, wh, preferred_element_type=f32)
        sg = _sigmoid(g[:, 0:3 * SW])                   # i,f,o: one EUP pass over 384 lanes
        tg = jnp.tanh(g[:, 3 * SW:4 * SW])              # g:     one EUP pass over 128 lanes
        c = sg[:, SW:2 * SW] * c + sg[:, 0:SW] * tg
        if s == 0:
            c = c * mask_l0                             # layer-1 lags one step: keep its state 0
        h = sg[:, 2 * SW:3 * SW] * jnp.tanh(c)
        if s >= 1:
            # row-block t = s-1 holds [h0_{t+1} | h1_t]; only the h1 half is consumed later.
            hseq_ref[(s - 1) * BP:s * BP, :] = h

    # ---- fused alpha/beta attention heads: one lane-dense (T*BP,SW)@(SW,128) matmul ----
    w_head = slabB_ref[RB_WHEAD:RB_WHEAD + SW, :]       # h0 rows are zero
    b_head = slabB_ref[RB_BHEAD:RB_BHEAD + 1, :]
    head = jnp.dot(hseq_ref[...], w_head, preferred_element_type=f32) + b_head  # (T*BP, 128)
    # head columns: 0 alpha_mu | 1 alpha_sigma | H:2H beta_mu | 2H:3H beta_sigma

    eps_b = eps_ref[:, 0:H]
    eps_a = eps_ref[:, H:H + 1]
    logit = head[:, 0:1] + _softplus(head[:, 1:2]) * eps_a                       # (T*BP, 1)
    beta_att = jnp.tanh(head[:, H:2 * H] + _softplus(head[:, 2 * H:3 * H]) * eps_b)

    # ---- softmax over (reversed) time fused with the attention-weighted sum ----
    # sum_t softmax_t(l) * v_t == (sum_t e_t * v_t) / (sum_t e_t); a global max shift is exact.
    m = jnp.max(logit, axis=0, keepdims=True)                                    # (1, 1)
    e = jnp.exp(logit - m)                                                       # (T*BP, 1)

    w_embed = slabB_ref[RB_WEMB:RB_WEMB + IN_DIM, 0:H]                           # (IN_DIM, H)
    rev_emb = jnp.dot(x_ref[0:T * BP, :], w_embed, preferred_element_type=f32)   # (T*BP, H)
    weighted = e * rev_emb * beta_att                                            # (T*BP, H)

    psum = slabB_ref[RB_PSUM:RB_PSUM + BP, 0:T * BP]                             # (BP, T*BP) 0/1
    wide = jnp.concatenate([weighted, e], axis=1)                                # (T*BP, H+1)
    red = jnp.dot(psum, wide, preferred_element_type=f32)                        # (BP, H+1)
    c_i = red[:, 0:H] * pl.reciprocal(red[:, H:H + 1], approx=True)              # (BP, H)

    # ---- output linear (lane-padded to 128 columns for an unmasked dense store) ----
    w_out = slabB_ref[RB_WOUT:RB_WOUT + H, :]
    b_out = slabB_ref[RB_BOUT:RB_BOUT + 1, :]
    out_ref[...] = jnp.dot(c_i, w_out, preferred_element_type=f32) + b_out


# ------------------------- wrapper-side packing (layout only) -------------------------

def pack_params(params):
    """One-time re-layout of the original per-LSTM (i|f|g|o) weights into two DMA slabs."""
    (w_embed, w_ih_a, w_hh_a, b_a, w_ih_b, w_hh_b, b_b,
     w_amu, b_amu, w_asig, b_asig, w_bmu, b_bmu, w_bsig, b_bsig,
     w_out, b_out) = [np.asarray(p, np.float32) for p in params]

    torch_slc = {"i": slice(0, H), "f": slice(H, 2 * H),
                 "g": slice(2 * H, 3 * H), "o": slice(3 * H, 4 * H)}
    new_order = ("i", "f", "o", "g")      # all sigmoid gates first, tanh gate last

    def col(gi, layer, stream):
        base = gi * SW + layer * 2 * H + stream * H
        return slice(base, base + H)

    wx = np.zeros((IN_DIM, GW), np.float32)
    wh = np.zeros((SW, GW), np.float32)
    bc = np.zeros((1, GW), np.float32)
    for gi, gname in enumerate(new_order):
        ts = torch_slc[gname]
        # layer-0 input weights with the embed matmul folded in
        wx[:, col(gi, 0, 0)] = w_embed @ w_ih_a[0][:, ts]
        wx[:, col(gi, 0, 1)] = w_embed @ w_ih_b[0][:, ts]
        # recurrent weights, layer 0 (rows = h0)
        wh[0:H, col(gi, 0, 0)] = w_hh_a[0][:, ts]
        wh[H:2 * H, col(gi, 0, 1)] = w_hh_b[0][:, ts]
        # layer-1 INPUT weights driven by h0 (wavefront: layer 1 lags by one step)
        wh[0:H, col(gi, 1, 0)] = w_ih_a[1][:, ts]
        wh[H:2 * H, col(gi, 1, 1)] = w_ih_b[1][:, ts]
        # recurrent weights, layer 1 (rows = h1)
        wh[2 * H:3 * H, col(gi, 1, 0)] = w_hh_a[1][:, ts]
        wh[3 * H:4 * H, col(gi, 1, 1)] = w_hh_b[1][:, ts]
        # combined biases (b_ih + b_hh already summed)
        bc[:, col(gi, 0, 0)] = b_a[0][:, ts]
        bc[:, col(gi, 0, 1)] = b_b[0][:, ts]
        bc[:, col(gi, 1, 0)] = b_a[1][:, ts]
        bc[:, col(gi, 1, 1)] = b_b[1][:, ts]
    slabA = np.concatenate([wx, wh, bc], axis=0)        # (SA_ROWS, GW)

    slabB = np.zeros((SB_ROWS, 128), np.float32)
    # fused attention-head weights applied to the full [h0|h1] state (h0 rows stay zero)
    slabB[RB_WHEAD + 2 * H:RB_WHEAD + 3 * H, 0:1] = w_amu
    slabB[RB_WHEAD + 2 * H:RB_WHEAD + 3 * H, 1:2] = w_asig
    slabB[RB_WHEAD + 3 * H:RB_WHEAD + 4 * H, H:2 * H] = w_bmu
    slabB[RB_WHEAD + 3 * H:RB_WHEAD + 4 * H, 2 * H:3 * H] = w_bsig
    slabB[RB_BHEAD, 0:1] = b_amu.ravel()
    slabB[RB_BHEAD, 1:2] = b_asig.ravel()
    slabB[RB_BHEAD, H:2 * H] = b_bmu.ravel()
    slabB[RB_BHEAD, 2 * H:3 * H] = b_bsig.ravel()
    slabB[RB_WEMB:RB_WEMB + IN_DIM, 0:H] = w_embed
    slabB[RB_WOUT:RB_WOUT + H, 0:OUT_DIM] = w_out
    slabB[RB_BOUT, 0:OUT_DIM] = b_out.ravel()
    for t in range(T):                                   # 0/1 time-sum selection matrix
        for b in range(BP):
            slabB[RB_PSUM + b, t * BP + b] = 1.0
    slabB[RB_MASK, 0:2 * H] = 1.0                        # layer-0 half of the state mask

    return jnp.asarray(slabA), jnp.asarray(slabB)


def pack_inputs(x, eps_a, eps_b):
    """Layout plumbing only: reverse time, pad batch 2->8, add one zero pad step."""
    xr = jnp.transpose(jnp.flip(x, axis=1), (1, 0, 2))            # (T, B, IN_DIM), reversed time
    xr = jnp.pad(xr, ((0, 1), (0, BP - B), (0, 0)))               # (T+1, BP, IN_DIM)
    x_flat = xr.reshape((T + 1) * BP, IN_DIM)

    eb = jnp.pad(eps_b, ((0, 0), (0, BP - B), (0, 0)))            # (T, BP, H)
    ea = jnp.pad(eps_a[..., None], ((0, 0), (0, BP - B), (0, 0))) # (T, BP, 1)
    eps_flat = jnp.concatenate([eb, ea], axis=-1).reshape(T * BP, H + 1)
    return x_flat, eps_flat


def ua_forward(x, slabA, slabB, eps_a, eps_b):
    """x: (B, T, IN_DIM); eps_a: (T, B); eps_b: (T, B, H) (t = reversed-time index)."""
    x_flat, eps_flat = pack_inputs(x, eps_a, eps_b)
    # TODO(synk): for many independent sequences, add a parallel batch grid to use both
    # v7x TensorCores; at B=2 the kernel is a single latency-bound invocation.
    out = pl.pallas_call(
        ua_kernel,
        out_shape=jax.ShapeDtypeStruct((BP, OUT_PAD), jnp.float32),
        in_specs=[pl.BlockSpec(memory_space=pltpu.MemorySpace.VMEM)] * 4,
        out_specs=pl.BlockSpec(memory_space=pltpu.MemorySpace.VMEM),
        scratch_shapes=[pltpu.VMEM((T * BP, SW), jnp.float32)],
    )(x_flat, slabA, slabB, eps_flat)
    return out[:B, :OUT_DIM]


# ------------------------- parameters & pure-JAX reference -------------------------

def init_params(key):
    """Deterministic synthetic parameters with the same shapes as the torch module,
    stored pre-transposed as (in_features, out_features), gate order i|f|g|o."""
    keys = jax.random.split(key, 16)
    sc = 0.1

    def rnd(k, shape):
        return (sc * jax.random.normal(k, shape)).astype(jnp.float32)

    w_embed = rnd(keys[0], (IN_DIM, HID))                       # embed.weight^T

    def lstm_params(k):
        ks = jax.random.split(k, 4)
        w_ih = rnd(ks[0], (NUM_LAYERS, HID, 4 * HID))
        w_hh = rnd(ks[1], (NUM_LAYERS, HID, 4 * HID))
        b_ih = rnd(ks[2], (NUM_LAYERS, 1, 4 * HID))
        b_hh = rnd(ks[3], (NUM_LAYERS, 1, 4 * HID))
        return w_ih, w_hh, (b_ih + b_hh)                        # biases pre-summed

    w_ih_a, w_hh_a, b_a = lstm_params(keys[1])
    w_ih_b, w_hh_b, b_b = lstm_params(keys[2])

    w_amu = rnd(keys[3], (HID, 1))
    b_amu = rnd(keys[4], (1, 1))
    w_asig = rnd(keys[5], (HID, 1))
    b_asig = rnd(keys[6], (1, 1))
    w_bmu = rnd(keys[7], (HID, HID))
    b_bmu = rnd(keys[8], (1, HID))
    w_bsig = rnd(keys[9], (HID, HID))
    b_bsig = rnd(keys[10], (1, HID))
    w_out = rnd(keys[11], (HID, OUT_DIM))
    b_out = rnd(keys[12], (1, OUT_DIM))

    return (
        w_embed,
        w_ih_a, w_hh_a, b_a,
        w_ih_b, w_hh_b, b_b,
        w_amu, b_amu, w_asig, b_asig,
        w_bmu, b_bmu, w_bsig, b_bsig,
        w_out, b_out,
    )


def ua_reference(x, params, eps_a, eps_b):
    """Pure-JAX reference mirroring the PyTorch forward (eval mode), using the
    ORIGINAL per-LSTM weights, to validate the fused/packed kernel layout."""
    (w_embed, w_ih_a, w_hh_a, b_a, w_ih_b, w_hh_b, b_b,
     w_amu, b_amu, w_asig, b_asig, w_bmu, b_bmu, w_bsig, b_bsig,
     w_out, b_out) = params

    emb = x @ w_embed                                   # (B, T, H)
    rev = jnp.flip(emb, axis=1)

    def lstm(seq, w_ih, w_hh, bias):
        cur = seq
        for layer in range(NUM_LAYERS):
            h = jnp.zeros((B, H), jnp.float32)
            c = jnp.zeros((B, H), jnp.float32)
            outs = []
            for t in range(T):
                g = cur[:, t] @ w_ih[layer] + h @ w_hh[layer] + bias[layer]
                i = jax.nn.sigmoid(g[:, 0:H])
                f = jax.nn.sigmoid(g[:, H:2 * H])
                gg = jnp.tanh(g[:, 2 * H:3 * H])
                o = jax.nn.sigmoid(g[:, 3 * H:4 * H])
                c = f * c + i * gg
                h = o * jnp.tanh(c)
                outs.append(h)
            cur = jnp.stack(outs, axis=1)
        return cur                                      # (B, T, H)

    a_out = lstm(rev, w_ih_a, w_hh_a, b_a)
    b_out2 = lstm(rev, w_ih_b, w_hh_b, b_b)

    amu = a_out @ w_amu + b_amu                         # (B, T, 1)
    asg = jax.nn.softplus(a_out @ w_asig + b_asig)
    alpha = amu + asg * eps_a.T[:, :, None]
    alpha_att = jax.nn.softmax(alpha, axis=1)           # (B, T, 1)

    bmu = b_out2 @ w_bmu + b_bmu
    bsg = jax.nn.softplus(b_out2 @ w_bsig + b_bsig)
    beta_att = jnp.tanh(bmu + bsg * jnp.transpose(eps_b, (1, 0, 2)))   # (B, T, H)

    c_i = jnp.sum(emb * jnp.flip(alpha_att, axis=1) * jnp.flip(beta_att, axis=1), axis=1)
    return c_i @ w_out + b_out


if __name__ == "__main__":
    key = jax.random.PRNGKey(0)
    k_param, k_x, k_ea, k_eb = jax.random.split(key, 4)

    params = init_params(k_param)
    slabA, slabB = pack_params(params)

    x = jax.random.normal(k_x, (B, T, IN_DIM), dtype=jnp.float32)
    eps_a = jax.random.normal(k_ea, (T, B), dtype=jnp.float32)        # noise (reversed-time, batch)
    eps_b = jax.random.normal(k_eb, (T, B, HID), dtype=jnp.float32)

    out = ua_forward(x, slabA, slabB, eps_a, eps_b)
    out = jax.block_until_ready(out)

    assert out.shape == (B, OUT_DIM)
    assert bool(jnp.all(jnp.isfinite(out)))

    # TODO(synk): inter-layer LSTM dropout (p=0.75) is training-mode only; eval semantics here.
    ref = ua_reference(x, params, eps_a, eps_b)
    np.testing.assert_allclose(np.asarray(out), np.asarray(ref), rtol=3e-2, atol=3e-3)
    print("KERNEL_OK")
</pallas_src>

<mosaic_0001>
module attributes {stable_mosaic.version = 11 : i64} {
  func.func @ua_kernel(%arg0: memref<72x16xf32, #tpu.memory_space<vmem>>, %arg1: memref<145x512xf32, #tpu.memory_space<vmem>>, %arg2: memref<208x128xf32, #tpu.memory_space<vmem>>, %arg3: memref<64x33xf32, #tpu.memory_space<vmem>>, %arg4: memref<8x128xf32, #tpu.memory_space<vmem>>, %arg5: memref<64x128xf32, #tpu.memory_space<vmem>>) attributes {dimension_semantics = [], scalar_prefetch = 0 : i64, scratch_operands = 1 : i64, tpu.core_type = #tpu.core_type<tc>} {
    %c0 = arith.constant 0 : index
    %c0_0 = arith.constant 0 : index
    %0 = vector.load %arg1[%c0, %c0_0] : memref<145x512xf32, #tpu.memory_space<vmem>>, vector<16x512xf32>
    %c16 = arith.constant 16 : index
    %c0_1 = arith.constant 0 : index
    %1 = vector.load %arg1[%c16, %c0_1] : memref<145x512xf32, #tpu.memory_space<vmem>>, vector<128x512xf32>
    %c144 = arith.constant 144 : index
    %c0_2 = arith.constant 0 : index
    %2 = vector.load %arg1[%c144, %c0_2] : memref<145x512xf32, #tpu.memory_space<vmem>>, vector<1x512xf32>
    %c0_3 = arith.constant 0 : index
    %c0_4 = arith.constant 0 : index
    %3 = vector.load %arg0[%c0_3, %c0_4] : memref<72x16xf32, #tpu.memory_space<vmem>>, vector<72x16xf32>
    %cst = arith.constant dense<0.000000e+00> : vector<72x512xf32>
    %4 = tpu.matmul %3, %0, %cst {dimension_numbers = #tpu.dot_dimension_numbers<[1], [0], [0], [1], [0, 0, 1, 1], [], []>} : vector<72x16xf32>, vector<16x512xf32>, vector<72x512xf32> -> vector<72x512xf32>
    %5 = vector.broadcast %2 : vector<1x512xf32> to vector<72x512xf32>
    %6 = arith.addf %4, %5 : vector<72x512xf32>
    %c200 = arith.constant 200 : index
    %c0_5 = arith.constant 0 : index
    %7 = vector.load %arg2[%c200, %c0_5] : memref<208x128xf32, #tpu.memory_space<vmem>>, vector<1x128xf32>
    %cst_6 = arith.constant 0.000000e+00 : f32
    %8 = vector.broadcast %cst_6 : f32 to vector<8x128xf32>
    %cst_7 = arith.constant 0.000000e+00 : f32
    %9 = vector.broadcast %cst_7 : f32 to vector<8x128xf32>
    %10 = vector.extract_strided_slice %6 {offsets = [0, 0], sizes = [8, 512], strides = [1, 1]} : vector<72x512xf32> to vector<8x512xf32>
    %cst_8 = arith.constant dense<0.000000e+00> : vector<8x512xf32>
    %11 = tpu.matmul %8, %1, %cst_8 {dimension_numbers = #tpu.dot_dimension_numbers<[1], [0], [0], [1], [0, 0, 1, 1], [], []>} : vector<8x128xf32>, vector<128x512xf32>, vector<8x512xf32> -> vector<8x512xf32>
    %12 = arith.addf %10, %11 : vector<8x512xf32>
    %13 = vector.extract_strided_slice %12 {offsets = [0, 0], sizes = [8, 384], strides = [1, 1]} : vector<8x512xf32> to vector<8x384xf32>
    %cst_9 = arith.constant 5.000000e-01 : f32
    %14 = vector.broadcast %cst_9 : f32 to vector<8x384xf32>
    %15 = arith.mulf %14, %13 : vector<8x384xf32>
    %16 = math.tanh %15 : vector<8x384xf32>
    %cst_10 = arith.constant 5.000000e-01 : f32
    %17 = vector.broadcast %cst_10 : f32 to vector<8x384xf32>
    %18 = arith.mulf %17, %16 : vector<8x384xf32>
    %cst_11 = arith.constant 5.000000e-01 : f32
    %19 = vector.broadcast %cst_11 : f32 to vector<8x384xf32>
    %20 = arith.addf %18, %19 : vector<8x384xf32>
    %21 = vector.extract_strided_slice %12 {offsets = [0, 384], sizes = [8, 128], strides = [1, 1]} : vector<8x512xf32> to vector<8x128xf32>
    %22 = math.tanh %21 : vector<8x128xf32>
    %23 = vector.extract_strided_slice %20 {offsets = [0, 128], sizes = [8, 128], strides = [1, 1]} : vector<8x384xf32> to vector<8x128xf32>
    %24 = arith.mulf %23, %9 : vector<8x128xf32>
    %25 = vector.extract_strided_slice %20 {offsets = [0, 0], sizes = [8, 128], strides = [1, 1]} : vector<8x384xf32> to vector<8x128xf32>
    %26 = arith.mulf %25, %22 : vector<8x128xf32>
    %27 = arith.addf %24, %26 : vector<8x128xf32>
    %28 = vector.broadcast %7 : vector<1x128xf32> to vector<8x128xf32>
    %29 = arith.mulf %27, %28 : vector<8x128xf32>
    %30 = vector.extract_strided_slice %20 {offsets = [0, 256], sizes = [8, 128], strides = [1, 1]} : vector<8x384xf32> to vector<8x128xf32>
    %31 = math.tanh %29 : vector<8x128xf32>
    %32 = arith.mulf %30, %31 : vector<8x128xf32>
    %33 = vector.extract_strided_slice %6 {offsets = [8, 0], sizes = [8, 512], strides = [1, 1]} : vector<72x512xf32> to vector<8x512xf32>
    %cst_12 = arith.constant dense<0.000000e+00> : vector<8x512xf32>
    %34 = tpu.matmul %32, %1, %cst_12 {dimension_numbers = #tpu.dot_dimension_numbers<[1], [0], [0], [1], [0, 0, 1, 1], [], []>} : vector<8x128xf32>, vector<128x512xf32>, vector<8x512xf32> -> vector<8x512xf32>
    %35 = arith.addf %33, %34 : vector<8x512xf32>
    %36 = vector.extract_strided_slice %35 {offsets = [0, 0], sizes = [8, 384], strides = [1, 1]} : vector<8x512xf32> to vector<8x384xf32>
    %cst_13 = arith.constant 5.000000e-01 : f32
    %37 = vector.broadcast %cst_13 : f32 to vector<8x384xf32>
    %38 = arith.mulf %37, %36 : vector<8x384xf32>
    %39 = math.tanh %38 : vector<8x384xf32>
    %cst_14 = arith.constant 5.000000e-01 : f32
    %40 = vector.broadcast %cst_14 : f32 to vector<8x384xf32>
    %41 = arith.mulf %40, %39 : vector<8x384xf32>
    %cst_15 = arith.constant 5.000000e-01 : f32
    %42 = vector.broadcast %cst_15 : f32 to vector<8x384xf32>
    %43 = arith.addf %41, %42 : vector<8x384xf32>
    %44 = vector.extract_strided_slice %35 {offsets = [0, 384], sizes = [8, 128], strides = [1, 1]} : vector<8x512xf32> to vector<8x128xf32>
    %45 = math.tanh %44 : vector<8x128xf32>
    %46 = vector.extract_strided_slice %43 {offsets = [0, 128], sizes = [8, 128], strides = [1, 1]} : vector<8x384xf32> to vector<8x128xf32>
    %47 = arith.mulf %46, %29 : vector<8x128xf32>
    %48 = vector.extract_strided_slice %43 {offsets = [0, 0], sizes = [8, 128], strides = [1, 1]} : vector<8x384xf32> to vector<8x128xf32>
    %49 = arith.mulf %48, %45 : vector<8x128xf32>
    %50 = arith.addf %47, %49 : vector<8x128xf32>
    %51 = vector.extract_strided_slice %43 {offsets = [0, 256], sizes = [8, 128], strides = [1, 1]} : vector<8x384xf32> to vector<8x128xf32>
    %52 = math.tanh %50 : vector<8x128xf32>
    %53 = arith.mulf %51, %52 : vector<8x128xf32>
    %c0_16 = arith.constant 0 : index
    %c0_17 = arith.constant 0 : index
    %54 = vector.load %arg5[%c0_16, %c0_17] : memref<64x128xf32, #tpu.memory_space<vmem>>, vector<8x128xf32>
    tpu.vector_store %arg5[%c0_16, %c0_17], %53 {strides = array<i32>} : memref<64x128xf32, #tpu.memory_space<vmem>>, vector<8x128xf32>,
    %55 = vector.extract_strided_slice %6 {offsets = [16, 0], sizes = [8, 512], strides = [1, 1]} : vector<72x512xf32> to vector<8x512xf32>
    %cst_18 = arith.constant dense<0.000000e+00> : vector<8x512xf32>
    %56 = tpu.matmul %53, %1, %cst_18 {dimension_numbers = #tpu.dot_dimension_numbers<[1], [0], [0], [1], [0, 0, 1, 1], [], []>} : vector<8x128xf32>, vector<128x512xf32>, vector<8x512xf32> -> vector<8x512xf32>
    %57 = arith.addf %55, %56 : vector<8x512xf32>
    %58 = vector.extract_strided_slice %57 {offsets = [0, 0], sizes = [8, 384], strides = [1, 1]} : vector<8x512xf32> to vector<8x384xf32>
    %cst_19 = arith.constant 5.000000e-01 : f32
    %59 = vector.broadcast %cst_19 : f32 to vector<8x384xf32>
    %60 = arith.mulf %59, %58 : vector<8x384xf32>
    %61 = math.tanh %60 : vector<8x384xf32>
    %cst_20 = arith.constant 5.000000e-01 : f32
    %62 = vector.broadcast %cst_20 : f32 to vector<8x384xf32>
    %63 = arith.mulf %62, %61 : vector<8x384xf32>
    %cst_21 = arith.constant 5.000000e-01 : f32
    %64 = vector.broadcast %cst_21 : f32 to vector<8x384xf32>
    %65 = arith.addf %63, %64 : vector<8x384xf32>
    %66 = vector.extract_strided_slice %57 {offsets = [0, 384], sizes = [8, 128], strides = [1, 1]} : vector<8x512xf32> to vector<8x128xf32>
    %67 = math.tanh %66 : vector<8x128xf32>
    %68 = vector.extract_strided_slice %65 {offsets = [0, 128], sizes = [8, 128], strides = [1, 1]} : vector<8x384xf32> to vector<8x128xf32>
    %69 = arith.mulf %68, %50 : vector<8x128xf32>
    %70 = vector.extract_strided_slice %65 {offsets = [0, 0], sizes = [8, 128], strides = [1, 1]} : vector<8x384xf32> to vector<8x128xf32>
    %71 = arith.mulf %70, %67 : vector<8x128xf32>
    %72 = arith.addf %69, %71 : vector<8x128xf32>
    %73 = vector.extract_strided_slice %65 {offsets = [0, 256], sizes = [8, 128], strides = [1, 1]} : vector<8x384xf32> to vector<8x128xf32>
    %74 = math.tanh %72 : vector<8x128xf32>
    %75 = arith.mulf %73, %74 : vector<8x128xf32>
    %c8 = arith.constant 8 : index
    %c0_22 = arith.constant 0 : index
    %76 = vector.load %arg5[%c8, %c0_22] : memref<64x128xf32, #tpu.memory_space<vmem>>, vector<8x128xf32>
    tpu.vector_store %arg5[%c8, %c0_22], %75 {strides = array<i32>} : memref<64x128xf32, #tpu.memory_space<vmem>>, vector<8x128xf32>,
    %77 = vector.extract_strided_slice %6 {offsets = [24, 0], sizes = [8, 512], strides = [1, 1]} : vector<72x512xf32> to vector<8x512xf32>
    %cst_23 = arith.constant dense<0.000000e+00> : vector<8x512xf32>
    %78 = tpu.matmul %75, %1, %cst_23 {dimension_numbers = #tpu.dot_dimension_numbers<[1], [0], [0], [1], [0, 0, 1, 1], [], []>} : vector<8x128xf32>, vector<128x512xf32>, vector<8x512xf32> -> vector<8x512xf32>
    %79 = arith.addf %77, %78 : vector<8x512xf32>
    %80 = vector.extract_strided_slice %79 {offsets = [0, 0], sizes = [8, 384], strides = [1, 1]} : vector<8x512xf32> to vector<8x384xf32>
    %cst_24 = arith.constant 5.000000e-01 : f32
    %81 = vector.broadcast %cst_24 : f32 to vector<8x384xf32>
    %82 = arith.mulf %81, %80 : vector<8x384xf32>
    %83 = math.tanh %82 : vector<8x384xf32>
    %cst_25 = arith.constant 5.000000e-01 : f32
    %84 = vector.broadcast %cst_25 : f32 to vector<8x384xf32>
    %85 = arith.mulf %84, %83 : vector<8x384xf32>
    %cst_26 = arith.constant 5.000000e-01 : f32
    %86 = vector.broadcast %cst_26 : f32 to vector<8x384xf32>
    %87 = arith.addf %85, %86 : vector<8x384xf32>
    %88 = vector.extract_strided_slice %79 {offsets = [0, 384], sizes = [8, 128], strides = [1, 1]} : vector<8x512xf32> to vector<8x128xf32>
    %89 = math.tanh %88 : vector<8x128xf32>
    %90 = vector.extract_strided_slice %87 {offsets = [0, 128], sizes = [8, 128], strides = [1, 1]} : vector<8x384xf32> to vector<8x128xf32>
    %91 = arith.mulf %90, %72 : vector<8x128xf32>
    %92 = vector.extract_strided_slice %87 {offsets = [0, 0], sizes = [8, 128], strides = [1, 1]} : vector<8x384xf32> to vector<8x128xf32>
    %93 = arith.mulf %92, %89 : vector<8x128xf32>
    %94 = arith.addf %91, %93 : vector<8x128xf32>
    %95 = vector.extract_strided_slice %87 {offsets = [0, 256], sizes = [8, 128], strides = [1, 1]} : vector<8x384xf32> to vector<8x128xf32>
    %96 = math.tanh %94 : vector<8x128xf32>
    %97 = arith.mulf %95, %96 : vector<8x128xf32>
    %c16_27 = arith.constant 16 : index
    %c0_28 = arith.constant 0 : index
    %98 = vector.load %arg5[%c16_27, %c0_28] : memref<64x128xf32, #tpu.memory_space<vmem>>, vector<8x128xf32>
    tpu.vector_store %arg5[%c16_27, %c0_28], %97 {strides = array<i32>} : memref<64x128xf32, #tpu.memory_space<vmem>>, vector<8x128xf32>,
    %99 = vector.extract_strided_slice %6 {offsets = [32, 0], sizes = [8, 512], strides = [1, 1]} : vector<72x512xf32> to vector<8x512xf32>
    %cst_29 = arith.constant dense<0.000000e+00> : vector<8x512xf32>
    %100 = tpu.matmul %97, %1, %cst_29 {dimension_numbers = #tpu.dot_dimension_numbers<[1], [0], [0], [1], [0, 0, 1, 1], [], []>} : vector<8x128xf32>, vector<128x512xf32>, vector<8x512xf32> -> vector<8x512xf32>
    %101 = arith.addf %99, %100 : vector<8x512xf32>
    %102 = vector.extract_strided_slice %101 {offsets = [0, 0], sizes = [8, 384], strides = [1, 1]} : vector<8x512xf32> to vector<8x384xf32>
    %cst_30 = arith.constant 5.000000e-01 : f32
    %103 = vector.broadcast %cst_30 : f32 to vector<8x384xf32>
    %104 = arith.mulf %103, %102 : vector<8x384xf32>
    %105 = math.tanh %104 : vector<8x384xf32>
    %cst_31 = arith.constant 5.000000e-01 : f32
    %106 = vector.broadcast %cst_31 : f32 to vector<8x384xf32>
    %107 = arith.mulf %106, %105 : vector<8x384xf32>
    %cst_32 = arith.constant 5.000000e-01 : f32
    %108 = vector.broadcast %cst_32 : f32 to vector<8x384xf32>
    %109 = arith.addf %107, %108 : vector<8x384xf32>
    %110 = vector.extract_strided_slice %101 {offsets = [0, 384], sizes = [8, 128], strides = [1, 1]} : vector<8x512xf32> to vector<8x128xf32>
    %111 = math.tanh %110 : vector<8x128xf32>
    %112 = vector.extract_strided_slice %109 {offsets = [0, 128], sizes = [8, 128], strides = [1, 1]} : vector<8x384xf32> to vector<8x128xf32>
    %113 = arith.mulf %112, %94 : vector<8x128xf32>
    %114 = vector.extract_strided_slice %109 {offsets = [0, 0], sizes = [8, 128], strides = [1, 1]} : vector<8x384xf32> to vector<8x128xf32>
    %115 = arith.mulf %114, %111 : vector<8x128xf32>
    %116 = arith.addf %113, %115 : vector<8x128xf32>
    %117 = vector.extract_strided_slice %109 {offsets = [0, 256], sizes = [8, 128], strides = [1, 1]} : vector<8x384xf32> to vector<8x128xf32>
    %118 = math.tanh %116 : vector<8x128xf32>
    %119 = arith.mulf %117, %118 : vector<8x128xf32>
    %c24 = arith.constant 24 : index
    %c0_33 = arith.constant 0 : index
    %120 = vector.load %arg5[%c24, %c0_33] : memref<64x128xf32, #tpu.memory_space<vmem>>, vector<8x128xf32>
    tpu.vector_store %arg5[%c24, %c0_33], %119 {strides = array<i32>} : memref<64x128xf32, #tpu.memory_space<vmem>>, vector<8x128xf32>,
    %121 = vector.extract_strided_slice %6 {offsets = [40, 0], sizes = [8, 512], strides = [1, 1]} : vector<72x512xf32> to vector<8x512xf32>
    %cst_34 = arith.constant dense<0.000000e+00> : vector<8x512xf32>
    %122 = tpu.matmul %119, %1, %cst_34 {dimension_numbers = #tpu.dot_dimension_numbers<[1], [0], [0], [1], [0, 0, 1, 1], [], []>} : vector<8x128xf32>, vector<128x512xf32>, vector<8x512xf32> -> vector<8x512xf32>
    %123 = arith.addf %121, %122 : vector<8x512xf32>
    %124 = vector.extract_strided_slice %123 {offsets = [0, 0], sizes = [8, 384], strides = [1, 1]} : vector<8x512xf32> to vector<8x384xf32>
    %cst_35 = arith.constant 5.000000e-01 : f32
    %125 = vector.broadcast %cst_35 : f32 to vector<8x384xf32>
    %126 = arith.mulf %125, %124 : vector<8x384xf32>
    %127 = math.tanh %126 : vector<8x384xf32>
    %cst_36 = arith.constant 5.000000e-01 : f32
    %128 = vector.broadcast %cst_36 : f32 to vector<8x384xf32>
    %129 = arith.mulf %128, %127 : vector<8x384xf32>
    %cst_37 = arith.constant 5.000000e-01 : f32
    %130 = vector.broadcast %cst_37 : f32 to vector<8x384xf32>
    %131 = arith.addf %129, %130 : vector<8x384xf32>
    %132 = vector.extract_strided_slice %123 {offsets = [0, 384], sizes = [8, 128], strides = [1, 1]} : vector<8x512xf32> to vector<8x128xf32>
    %133 = math.tanh %132 : vector<8x128xf32>
    %134 = vector.extract_strided_slice %131 {offsets = [0, 128], sizes = [8, 128], strides = [1, 1]} : vector<8x384xf32> to vector<8x128xf32>
    %135 = arith.mulf %134, %116 : vector<8x128xf32>
    %136 = vector.extract_strided_slice %131 {offsets = [0, 0], sizes = [8, 128], strides = [1, 1]} : vector<8x384xf32> to vector<8x128xf32>
    %137 = arith.mulf %136, %133 : vector<8x128xf32>
    %138 = arith.addf %135, %137 : vector<8x128xf32>
    %139 = vector.extract_strided_slice %131 {offsets = [0, 256], sizes = [8, 128], strides = [1, 1]} : vector<8x384xf32> to vector<8x128xf32>
    %140 = math.tanh %138 : vector<8x128xf32>
    %141 = arith.mulf %139, %140 : vector<8x128xf32>
    %c32 = arith.constant 32 : index
    %c0_38 = arith.constant 0 : index
    %142 = vector.load %arg5[%c32, %c0_38] : memref<64x128xf32, #tpu.memory_space<vmem>>, vector<8x128xf32>
    tpu.vector_store %arg5[%c32, %c0_38], %141 {strides = array<i32>} : memref<64x128xf32, #tpu.memory_space<vmem>>, vector<8x128xf32>,
    %143 = vector.extract_strided_slice %6 {offsets = [48, 0], sizes = [8, 512], strides = [1, 1]} : vector<72x512xf32> to vector<8x512xf32>
    %cst_39 = arith.constant dense<0.000000e+00> : vector<8x512xf32>
    %144 = tpu.matmul %141, %1, %cst_39 {dimension_numbers = #tpu.dot_dimension_numbers<[1], [0], [0], [1], [0, 0, 1, 1], [], []>} : vector<8x128xf32>, vector<128x512xf32>, vector<8x512xf32> -> vector<8x512xf32>
    %145 = arith.addf %143, %144 : vector<8x512xf32>
    %146 = vector.extract_strided_slice %145 {offsets = [0, 0], sizes = [8, 384], strides = [1, 1]} : vector<8x512xf32> to vector<8x384xf32>
    %cst_40 = arith.constant 5.000000e-01 : f32
    %147 = vector.broadcast %cst_40 : f32 to vector<8x384xf32>
    %148 = arith.mulf %147, %146 : vector<8x384xf32>
    %149 = math.tanh %148 : vector<8x384xf32>
    %cst_41 = arith.constant 5.000000e-01 : f32
    %150 = vector.broadcast %cst_41 : f32 to vector<8x384xf32>
    %151 = arith.mulf %150, %149 : vector<8x384xf32>
    %cst_42 = arith.constant 5.000000e-01 : f32
    %152 = vector.broadcast %cst_42 : f32 to vector<8x384xf32>
    %153 = arith.addf %151, %152 : vector<8x384xf32>
    %154 = vector.extract_strided_slice %145 {offsets = [0, 384], sizes = [8, 128], strides = [1, 1]} : vector<8x512xf32> to vector<8x128xf32>
    %155 = math.tanh %154 : vector<8x128xf32>
    %156 = vector.extract_strided_slice %153 {offsets = [0, 128], sizes = [8, 128], strides = [1, 1]} : vector<8x384xf32> to vector<8x128xf32>
    %157 = arith.mulf %156, %138 : vector<8x128xf32>
    %158 = vector.extract_strided_slice %153 {offsets = [0, 0], sizes = [8, 128], strides = [1, 1]} : vector<8x384xf32> to vector<8x128xf32>
    %159 = arith.mulf %158, %155 : vector<8x128xf32>
    %160 = arith.addf %157, %159 : vector<8x128xf32>
    %161 = vector.extract_strided_slice %153 {offsets = [0, 256], sizes = [8, 128], strides = [1, 1]} : vector<8x384xf32> to vector<8x128xf32>
    %162 = math.tanh %160 : vector<8x128xf32>
    %163 = arith.mulf %161, %162 : vector<8x128xf32>
    %c40 = arith.constant 40 : index
    %c0_43 = arith.constant 0 : index
    %164 = vector.load %arg5[%c40, %c0_43] : memref<64x128xf32, #tpu.memory_space<vmem>>, vector<8x128xf32>
    tpu.vector_store %arg5[%c40, %c0_43], %163 {strides = array<i32>} : memref<64x128xf32, #tpu.memory_space<vmem>>, vector<8x128xf32>,
    %165 = vector.extract_strided_slice %6 {offsets = [56, 0], sizes = [8, 512], strides = [1, 1]} : vector<72x512xf32> to vector<8x512xf32>
    %cst_44 = arith.constant dense<0.000000e+00> : vector<8x512xf32>
    %166 = tpu.matmul %163, %1, %cst_44 {dimension_numbers = #tpu.dot_dimension_numbers<[1], [0], [0], [1], [0, 0, 1, 1], [], []>} : vector<8x128xf32>, vector<128x512xf32>, vector<8x512xf32> -> vector<8x512xf32>
    %167 = arith.addf %165, %166 : vector<8x512xf32>
    %168 = vector.extract_strided_slice %167 {offsets = [0, 0], sizes = [8, 384], strides = [1, 1]} : vector<8x512xf32> to vector<8x384xf32>
    %cst_45 = arith.constant 5.000000e-01 : f32
    %169 = vector.broadcast %cst_45 : f32 to vector<8x384xf32>
    %170 = arith.mulf %169, %168 : vector<8x384xf32>
    %171 = math.tanh %170 : vector<8x384xf32>
    %cst_46 = arith.constant 5.000000e-01 : f32
    %172 = vector.broadcast %cst_46 : f32 to vector<8x384xf32>
    %173 = arith.mulf %172, %171 : vector<8x384xf32>
    %cst_47 = arith.constant 5.000000e-01 : f32
    %174 = vector.broadcast %cst_47 : f32 to vector<8x384xf32>
    %175 = arith.addf %173, %174 : vector<8x384xf32>
    %176 = vector.extract_strided_slice %167 {offsets = [0, 384], sizes = [8, 128], strides = [1, 1]} : vector<8x512xf32> to vector<8x128xf32>
    %177 = math.tanh %176 : vector<8x128xf32>
    %178 = vector.extract_strided_slice %175 {offsets = [0, 128], sizes = [8, 128], strides = [1, 1]} : vector<8x384xf32> to vector<8x128xf32>
    %179 = arith.mulf %178, %160 : vector<8x128xf32>
    %180 = vector.extract_strided_slice %175 {offsets = [0, 0], sizes = [8, 128], strides = [1, 1]} : vector<8x384xf32> to vector<8x128xf32>
    %181 = arith.mulf %180, %177 : vector<8x128xf32>
    %182 = arith.addf %179, %181 : vector<8x128xf32>
    %183 = vector.extract_strided_slice %175 {offsets = [0, 256], sizes = [8, 128], strides = [1, 1]} : vector<8x384xf32> to vector<8x128xf32>
    %184 = math.tanh %182 : vector<8x128xf32>
    %185 = arith.mulf %183, %184 : vector<8x128xf32>
    %c48 = arith.constant 48 : index
    %c0_48 = arith.constant 0 : index
    %186 = vector.load %arg5[%c48, %c0_48] : memref<64x128xf32, #tpu.memory_space<vmem>>, vector<8x128xf32>
    tpu.vector_store %arg5[%c48, %c0_48], %185 {strides = array<i32>} : memref<64x128xf32, #tpu.memory_space<vmem>>, vector<8x128xf32>,
    %187 = vector.extract_strided_slice %6 {offsets = [64, 0], sizes = [8, 512], strides = [1, 1]} : vector<72x512xf32> to vector<8x512xf32>
    %cst_49 = arith.constant dense<0.000000e+00> : vector<8x512xf32>
    %188 = tpu.matmul %185, %1, %cst_49 {dimension_numbers = #tpu.dot_dimension_numbers<[1], [0], [0], [1], [0, 0, 1, 1], [], []>} : vector<8x128xf32>, vector<128x512xf32>, vector<8x512xf32> -> vector<8x512xf32>
    %189 = arith.addf %187, %188 : vector<8x512xf32>
    %190 = vector.extract_strided_slice %189 {offsets = [0, 0], sizes = [8, 384], strides = [1, 1]} : vector<8x512xf32> to vector<8x384xf32>
    %cst_50 = arith.constant 5.000000e-01 : f32
    %191 = vector.broadcast %cst_50 : f32 to vector<8x384xf32>
    %192 = arith.mulf %191, %190 : vector<8x384xf32>
    %193 = math.tanh %192 : vector<8x384xf32>
    %cst_51 = arith.constant 5.000000e-01 : f32
    %194 = vector.broadcast %cst_51 : f32 to vector<8x384xf32>
    %195 = arith.mulf %194, %193 : vector<8x384xf32>
    %cst_52 = arith.constant 5.000000e-01 : f32
    %196 = vector.broadcast %cst_52 : f32 to vector<8x384xf32>
    %197 = arith.addf %195, %196 : vector<8x384xf32>
    %198 = vector.extract_strided_slice %189 {offsets = [0, 384], sizes = [8, 128], strides = [1, 1]} : vector<8x512xf32> to vector<8x128xf32>
    %199 = math.tanh %198 : vector<8x128xf32>
    %200 = vector.extract_strided_slice %197 {offsets = [0, 128], sizes = [8, 128], strides = [1, 1]} : vector<8x384xf32> to vector<8x128xf32>
    %201 = arith.mulf %200, %182 : vector<8x128xf32>
    %202 = vector.extract_strided_slice %197 {offsets = [0, 0], sizes = [8, 128], strides = [1, 1]} : vector<8x384xf32> to vector<8x128xf32>
    %203 = arith.mulf %202, %199 : vector<8x128xf32>
    %204 = arith.addf %201, %203 : vector<8x128xf32>
    %205 = vector.extract_strided_slice %197 {offsets = [0, 256], sizes = [8, 128], strides = [1, 1]} : vector<8x384xf32> to vector<8x128xf32>
    %206 = math.tanh %204 : vector<8x128xf32>
    %207 = arith.mulf %205, %206 : vector<8x128xf32>
    %c56 = arith.constant 56 : index
    %c0_53 = arith.constant 0 : index
    %208 = vector.load %arg5[%c56, %c0_53] : memref<64x128xf32, #tpu.memory_space<vmem>>, vector<8x128xf32>
    tpu.vector_store %arg5[%c56, %c0_53], %207 {strides = array<i32>} : memref<64x128xf32, #tpu.memory_space<vmem>>, vector<8x128xf32>,
    %c0_54 = arith.constant 0 : index
    %c0_55 = arith.constant 0 : index
    %209 = vector.load %arg2[%c0_54, %c0_55] : memref<208x128xf32, #tpu.memory_space<vmem>>, vector<128x128xf32>
    %c128 = arith.constant 128 : index
    %c0_56 = arith.constant 0 : index
    %210 = vector.load %arg2[%c128, %c0_56] : memref<208x128xf32, #tpu.memory_space<vmem>>, vector<1x128xf32>
    %c0_57 = arith.constant 0 : index
    %c0_58 = arith.constant 0 : index
    %211 = vector.load %arg5[%c0_57, %c0_58] : memref<64x128xf32, #tpu.memory_space<vmem>>, vector<64x128xf32>
    %cst_59 = arith.constant dense<0.000000e+00> : vector<64x128xf32>
    %212 = tpu.matmul %211, %209, %cst_59 {dimension_numbers = #tpu.dot_dimension_numbers<[1], [0], [0], [1], [0, 0, 1, 1], [], []>} : vector<64x128xf32>, vector<128x128xf32>, vector<64x128xf32> -> vector<64x128xf32>
    %213 = vector.broadcast %210 : vector<1x128xf32> to vector<64x128xf32>
    %214 = arith.addf %212, %213 : vector<64x128xf32>
    %c0_60 = arith.constant 0 : index
    %c0_61 = arith.constant 0 : index
    %215 = vector.load %arg3[%c0_60, %c0_61] : memref<64x33xf32, #tpu.memory_space<vmem>>, vector<64x32xf32>
    %c0_62 = arith.constant 0 : index
    %c32_63 = arith.constant 32 : index
    %216 = vector.load %arg3[%c0_62, %c32_63] : memref<64x33xf32, #tpu.memory_space<vmem>>, vector<64x1xf32>
    %217 = vector.extract_strided_slice %214 {offsets = [0, 0], sizes = [64, 1], strides = [1, 1]} : vector<64x128xf32> to vector<64x1xf32>
    %218 = vector.extract_strided_slice %214 {offsets = [0, 1], sizes = [64, 1], strides = [1, 1]} : vector<64x128xf32> to vector<64x1xf32>
    %cst_64 = arith.constant 0.000000e+00 : f32
    %219 = vector.broadcast %cst_64 : f32 to vector<64x1xf32>
    %220 = arith.maximumf %218, %219 : vector<64x1xf32>
    %221 = math.absf %218 : vector<64x1xf32>
    %cst_65 = arith.constant 0.000000e+00 : f32
    %222 = vector.broadcast %cst_65 : f32 to vector<64x1xf32>
    %223 = arith.subf %222, %221 : vector<64x1xf32>
    %224 = math.exp %223 : vector<64x1xf32>
    %cst_66 = arith.constant 1.000000e+00 : f32
    %225 = vector.broadcast %cst_66 : f32 to vector<64x1xf32>
    %226 = arith.addf %225, %224 : vector<64x1xf32>
    %227 = math.log %226 : vector<64x1xf32>
    %228 = arith.addf %220, %227 : vector<64x1xf32>
    %229 = arith.mulf %228, %216 : vector<64x1xf32>
    %230 = arith.addf %217, %229 : vector<64x1xf32>
    %231 = vector.extract_strided_slice %214 {offsets = [0, 32], sizes = [64, 32], strides = [1, 1]} : vector<64x128xf32> to vector<64x32xf32>
    %232 = vector.extract_strided_slice %214 {offsets = [0, 64], sizes = [64, 32], strides = [1, 1]} : vector<64x128xf32> to vector<64x32xf32>
    %cst_67 = arith.constant 0.000000e+00 : f32
    %233 = vector.broadcast %cst_67 : f32 to vector<64x32xf32>
    %234 = arith.maximumf %232, %233 : vector<64x32xf32>
    %235 = math.absf %232 : vector<64x32xf32>
    %cst_68 = arith.constant 0.000000e+00 : f32
    %236 = vector.broadcast %cst_68 : f32 to vector<64x32xf32>
    %237 = arith.subf %236, %235 : vector<64x32xf32>
    %238 = math.exp %237 : vector<64x32xf32>
    %cst_69 = arith.constant 1.000000e+00 : f32
    %239 = vector.broadcast %cst_69 : f32 to vector<64x32xf32>
    %240 = arith.addf %239, %238 : vector<64x32xf32>
    %241 = math.log %240 : vector<64x32xf32>
    %242 = arith.addf %234, %241 : vector<64x32xf32>
    %243 = arith.mulf %242, %215 : vector<64x32xf32>
    %244 = arith.addf %231, %243 : vector<64x32xf32>
    %245 = math.tanh %244 : vector<64x32xf32>
    %cst_70 = arith.constant dense<0xFF800000> : vector<1xf32>
    %246 = vector.multi_reduction <maximumf>, %230, %cst_70 [0] : vector<64x1xf32> to vector<1xf32>
    %247 = vector.shape_cast %246 : vector<1xf32> to vector<1x1xf32>
    %248 = vector.broadcast %247 : vector<1x1xf32> to vector<64x1xf32>
    %249 = arith.subf %230, %248 : vector<64x1xf32>
    %250 = math.exp %249 : vector<64x1xf32>
    %c136 = arith.constant 136 : index
    %c0_71 = arith.constant 0 : index
    %251 = vector.load %arg2[%c136, %c0_71] : memref<208x128xf32, #tpu.memory_space<vmem>>, vector<16x32xf32>
    %c0_72 = arith.constant 0 : index
    %c0_73 = arith.constant 0 : index
    %252 = vector.load %arg0[%c0_72, %c0_73] : memref<72x16xf32, #tpu.memory_space<vmem>>, vector<64x16xf32>
    %cst_74 = arith.constant dense<0.000000e+00> : vector<64x32xf32>
    %253 = tpu.matmul %252, %251, %cst_74 {dimension_numbers = #tpu.dot_dimension_numbers<[1], [0], [0], [1], [0, 0, 1, 1], [], []>} : vector<64x16xf32>, vector<16x32xf32>, vector<64x32xf32> -> vector<64x32xf32>
    %254 = vector.broadcast %250 : vector<64x1xf32> to vector<64x32xf32>
    %255 = arith.mulf %254, %253 : vector<64x32xf32>
    %256 = arith.mulf %255, %245 : vector<64x32xf32>
    %c192 = arith.constant 192 : index
    %c0_75 = arith.constant 0 : index
    %257 = vector.load %arg2[%c192, %c0_75] : memref<208x128xf32, #tpu.memory_space<vmem>>, vector<8x64xf32>
    %258 = tpu.concatenate %256, %250 in 1 : vector<64x32xf32>, vector<64x1xf32> -> vector<64x33xf32>
    %cst_76 = arith.constant dense<0.000000e+00> : vector<8x33xf32>
    %259 = tpu.matmul %257, %258, %cst_76 {dimension_numbers = #tpu.dot_dimension_numbers<[1], [0], [0], [1], [0, 0, 1, 1], [], []>} : vector<8x64xf32>, vector<64x33xf32>, vector<8x33xf32> -> vector<8x33xf32>
    %260 = vector.extract_strided_slice %259 {offsets = [0, 0], sizes = [8, 32], strides = [1, 1]} : vector<8x33xf32> to vector<8x32xf32>
    %261 = vector.extract_strided_slice %259 {offsets = [0, 32], sizes = [8, 1], strides = [1, 1]} : vector<8x33xf32> to vector<8x1xf32>
    %262 = tpu.reciprocal %261 {approx = true} : vector<8x1xf32> -> vector<8x1xf32>
    %263 = vector.broadcast %262 : vector<8x1xf32> to vector<8x32xf32>
    %264 = arith.mulf %260, %263 : vector<8x32xf32>
    %c152 = arith.constant 152 : index
    %c0_77 = arith.constant 0 : index
    %265 = vector.load %arg2[%c152, %c0_77] : memref<208x128xf32, #tpu.memory_space<vmem>>, vector<32x128xf32>
    %c184 = arith.constant 184 : index
    %c0_78 = arith.constant 0 : index
    %266 = vector.load %arg2[%c184, %c0_78] : memref<208x128xf32, #tpu.memory_space<vmem>>, vector<1x128xf32>
    %cst_79 = arith.constant dense<0.000000e+00> : vector<8x128xf32>
    %267 = tpu.matmul %264, %265, %cst_79 {dimension_numbers = #tpu.dot_dimension_numbers<[1], [0], [0], [1], [0, 0, 1, 1], [], []>} : vector<8x32xf32>, vector<32x128xf32>, vector<8x128xf32> -> vector<8x128xf32>
    %268 = vector.broadcast %266 : vector<1x128xf32> to vector<8x128xf32>
    %269 = arith.addf %267, %268 : vector<8x128xf32>
    %c0_80 = arith.constant 0 : index
    %c0_81 = arith.constant 0 : index
    %270 = vector.load %arg4[%c0_80, %c0_81] : memref<8x128xf32, #tpu.memory_space<vmem>>, vector<8x128xf32>
    tpu.vector_store %arg4[%c0_80, %c0_81], %269 {strides = array<i32>} : memref<8x128xf32, #tpu.memory_space<vmem>>, vector<8x128xf32>,
    return
  }
}

</mosaic_0001>

<llo_original>
// kernel: tpu_custom_call.1
$region0: #{tpu_custom_call.1}
  #allocation0 [shape = 'u32[]', space=smem, size = 0x4, offset = 0x4, fixed_abs, tag = 'smem constant byte address 0x4 - core index']
  #allocation1 [shape = 'u32[72,128]{1,0:T(1,128)}', space=vmem, size = 0x9000, scoped, tag = 'internal scratch']
  #allocation2 [shape = 'f32[64,128]{1,0:T(8,128)}', space=vmem, size = 0x8000, scoped, tag = 'scratch operand']
  %s0 = inlined_call_operand.vmem [shape: f32[72,16], index: 0, kind: input, shape index: {}]
  %s1 = inlined_call_operand.hbm [shape: f32[145,512], index: 1, kind: input, shape index: {}]
  %s2 = inlined_call_operand.hbm [shape: f32[208,128], index: 2, kind: input, shape index: {}]
  %s3 = inlined_call_operand.vmem [shape: f32[64,33], index: 3, kind: input, shape index: {}]
  %s4 = inlined_call_operand.hbm [shape: f32[8,128], index: 4, kind: output, shape index: {}]
  %s5 = sld [smem:[#allocation0]]
  $region34: #{tpu_custom_call.1} parent=0
    _
  %s7 = ssub.s32 1, %s5
  %s8 = scalar_select 0, %s7, %s5
  $region1: #{tpu_custom_call.1} parent=0
    #allocation3 [shape = 'u8[311296]{0}', space=vmem, size = 0x4c000, scoped, tag = 'input window, operand 1, single buffered']
    #allocation4 [shape = 's32[1]{0}', space=sflag, size = 0x4, scoped, tag = 'scoped memory for tpu_custom_call.1']
    #allocation5 [shape = 's32[1]{0}', space=sflag, size = 0x4, scoped, tag = 'scoped memory for tpu_custom_call.1']
    #allocation6 [shape = 'u8[106496]{0}', space=vmem, size = 0x1a000, scoped, tag = 'input window, operand 2, single buffered']
    #allocation7 [shape = 's32[1]{0}', space=sflag, size = 0x4, scoped, tag = 'scoped memory for tpu_custom_call.1']
    #allocation8 [shape = 'u8[4096]{0}', space=vmem, size = 0x1000, scoped, tag = 'output window, operand 0, single buffered']
    %9 = vsyncpa [#allocation4], 0
    %10 = vsyncpa [#allocation7], 0
    %11 = vsyncpa [#allocation5], 0
    // Predicated region
    $region2: #{tpu_custom_call.1} parent=1 // pred_check
      _
    $region3: #{tpu_custom_call.1} parent=1 // pred_check_branch
      %13 = sbr.rel (0) target = $region5
    $region4: #{tpu_custom_call.1} parent=1 // pred_region
      _
    $region5: #{tpu_custom_call.1} parent=1 // pred_fallthru
      _
    // Predicated region
    $region6: #{tpu_custom_call.1} parent=1 // pred_check
      _
    $region7: #{tpu_custom_call.1} parent=1 // pred_check_branch
      %15 = sbr.rel (0) target = $region9
    $region8: #{tpu_custom_call.1} parent=1 // pred_region
      %17 = vsyncadd [#allocation4], 0
      %s18 = sshll.u32 %s1, 4
      %s19 = int_to_ptr.hbm [resolvable:$true] %s18
      %s20 = sshll.u32 [#allocation3], 4
      %s21 = int_to_ptr.vmem [resolvable:$true] %s20
      %26 = dma.hbm_to_vmem [thread:$0]  %s19, 9728, %s21, [#allocation4], 512, 512, 32
    $region9: #{tpu_custom_call.1} parent=1 // pred_fallthru
      _
    // Predicated region
    $region10: #{tpu_custom_call.1} parent=1 // pred_check
      _
    $region11: #{tpu_custom_call.1} parent=1 // pred_check_branch
      %28 = sbr.rel (0) target = $region13
    $region12: #{tpu_custom_call.1} parent=1 // pred_region
      %30 = vsyncadd [#allocation7], 0
      %s31 = sshll.u32 %s2, 4
      %s32 = int_to_ptr.hbm [resolvable:$true] %s31
      %s33 = sshll.u32 [#allocation6], 4
      %s34 = int_to_ptr.vmem [resolvable:$true] %s33
      %39 = dma.hbm_to_vmem [thread:$0]  %s32, 3328, %s34, [#allocation7], 128, 128, 8
    $region13: #{tpu_custom_call.1} parent=1 // pred_fallthru
      _
    // Predicated region
    $region14: #{tpu_custom_call.1} parent=1 // pred_check
      _
    $region15: #{tpu_custom_call.1} parent=1 // pred_check_branch
      %41 = sbr.rel (0) target = $region17
    $region16: #{tpu_custom_call.1} parent=1 // pred_region
      _
    $region17: #{tpu_custom_call.1} parent=1 // pred_fallthru
      _
    // Predicated region
    $region18: #{tpu_custom_call.1} parent=1 // pred_check
      _
    $region19: #{tpu_custom_call.1} parent=1 // pred_check_branch
      %43 = sbr.rel (0) target = $region21
    $region20: #{tpu_custom_call.1} parent=1 // pred_region
      %45 = dma.done [#allocation4], 9728
    $region21: #{tpu_custom_call.1} parent=1 // pred_fallthru
      _
    // Predicated region
    $region22: #{tpu_custom_call.1} parent=1 // pred_check
      _
    $region23: #{tpu_custom_call.1} parent=1 // pred_check_branch
      %47 = sbr.rel (0) target = $region25
    $region24: #{tpu_custom_call.1} parent=1 // pred_region
      %49 = dma.done [#allocation7], 3328
    $region25: #{tpu_custom_call.1} parent=1 // pred_fallthru
      _
    %v50 = vld [vmem:[#allocation3] sm:$0xff]
    %v51 = vld [vmem:[#allocation3 + $0x8] sm:$0xff]
    %v52 = vld [vmem:[#allocation3 + $0x10] sm:$0xff]
    %v53 = vld [vmem:[#allocation3 + $0x18] sm:$0xff]
    %v54 = vld [vmem:[#allocation3 + $0x20] sm:$0xff]
    %v55 = vld [vmem:[#allocation3 + $0x28] sm:$0xff]
    %v56 = vld [vmem:[#allocation3 + $0x30] sm:$0xff]
    %v57 = vld [vmem:[#allocation3 + $0x38] sm:$0xff]
    %v58 = vld [vmem:[#allocation3 + $0x40] sm:$0xff]
    %v59 = vld [vmem:[#allocation3 + $0x48] sm:$0xff]
    %v60 = vld [vmem:[#allocation3 + $0x50] sm:$0xff]
    %v61 = vld [vmem:[#allocation3 + $0x58] sm:$0xff]
    %v62 = vld [vmem:[#allocation3 + $0x60] sm:$0xff]
    %v63 = vld [vmem:[#allocation3 + $0x68] sm:$0xff]
    %v64 = vld [vmem:[#allocation3 + $0x70] sm:$0xff]
    %v65 = vld [vmem:[#allocation3 + $0x78] sm:$0xff]
    %v66 = vld [vmem:[#allocation3 + $0x80] sm:$0xff]
    %v67 = vld [vmem:[#allocation3 + $0x88] sm:$0xff]
    %v68 = vld [vmem:[#allocation3 + $0x90] sm:$0xff]
    %v69 = vld [vmem:[#allocation3 + $0x98] sm:$0xff]
    %v70 = vld [vmem:[#allocation3 + $0xa0] sm:$0xff]
    %v71 = vld [vmem:[#allocation3 + $0xa8] sm:$0xff]
    %v72 = vld [vmem:[#allocation3 + $0xb0] sm:$0xff]
    %v73 = vld [vmem:[#allocation3 + $0xb8] sm:$0xff]
    %v74 = vld [vmem:[#allocation3 + $0xc0] sm:$0xff]
    %v75 = vld [vmem:[#allocation3 + $0xc8] sm:$0xff]
    %v76 = vld [vmem:[#allocation3 + $0xd0] sm:$0xff]
    %v77 = vld [vmem:[#allocation3 + $0xd8] sm:$0xff]
    %v78 = vld [vmem:[#allocation3 + $0xe0] sm:$0xff]
    %v79 = vld [vmem:[#allocation3 + $0xe8] sm:$0xff]
    %v80 = vld [vmem:[#allocation3 + $0xf0] sm:$0xff]
    %v81 = vld [vmem:[#allocation3 + $0xf8] sm:$0xff]
    %v82 = vld [vmem:[#allocation3 + $0x100] sm:$0xff]
    %v83 = vld [vmem:[#allocation3 + $0x108] sm:$0xff]
    %v84 = vld [vmem:[#allocation3 + $0x110] sm:$0xff]
    %v85 = vld [vmem:[#allocation3 + $0x118] sm:$0xff]
    %v86 = vld [vmem:[#allocation3 + $0x120] sm:$0xff]
    %v87 = vld [vmem:[#allocation3 + $0x128] sm:$0xff]
    %v88 = vld [vmem:[#allocation3 + $0x130] sm:$0xff]
    %v89 = vld [vmem:[#allocation3 + $0x138] sm:$0xff]
    %v90 = vld [vmem:[#allocation3 + $0x140] sm:$0xff]
    %v91 = vld [vmem:[#allocation3 + $0x148] sm:$0xff]
    %v92 = vld [vmem:[#allocation3 + $0x150] sm:$0xff]
    %v93 = vld [vmem:[#allocation3 + $0x158] sm:$0xff]
    %v94 = vld [vmem:[#allocation3 + $0x160] sm:$0xff]
    %v95 = vld [vmem:[#allocation3 + $0x168] sm:$0xff]
    %v96 = vld [vmem:[#allocation3 + $0x170] sm:$0xff]
    %v97 = vld [vmem:[#allocation3 + $0x178] sm:$0xff]
    %v98 = vld [vmem:[#allocation3 + $0x180] sm:$0xff]
    %v99 = vld [vmem:[#allocation3 + $0x188] sm:$0xff]
    %v100 = vld [vmem:[#allocation3 + $0x190] sm:$0xff]
    %v101 = vld [vmem:[#allocation3 + $0x198] sm:$0xff]
    %v102 = vld [vmem:[#allocation3 + $0x1a0] sm:$0xff]
    %v103 = vld [vmem:[#allocation3 + $0x1a8] sm:$0xff]
    %v104 = vld [vmem:[#allocation3 + $0x1b0] sm:$0xff]
    %v105 = vld [vmem:[#allocation3 + $0x1b8] sm:$0xff]
    %v106 = vld [vmem:[#allocation3 + $0x1c0] sm:$0xff]
    %v107 = vld [vmem:[#allocation3 + $0x1c8] sm:$0xff]
    %v108 = vld [vmem:[#allocation3 + $0x1d0] sm:$0xff]
    %v109 = vld [vmem:[#allocation3 + $0x1d8] sm:$0xff]
    %v110 = vld [vmem:[#allocation3 + $0x1e0] sm:$0xff]
    %v111 = vld [vmem:[#allocation3 + $0x1e8] sm:$0xff]
    %v112 = vld [vmem:[#allocation3 + $0x1f0] sm:$0xff]
    %v113 = vld [vmem:[#allocation3 + $0x1f8] sm:$0xff]
    %v114 = vld [vmem:[#allocation3 + $0x200] sm:$0xff]
    %v115 = vld [vmem:[#allocation3 + $0x208] sm:$0xff]
    %v116 = vld [vmem:[#allocation3 + $0x210] sm:$0xff]
    %v117 = vld [vmem:[#allocation3 + $0x218] sm:$0xff]
    %v118 = vld [vmem:[#allocation3 + $0x220] sm:$0xff]
    %v119 = vld [vmem:[#allocation3 + $0x228] sm:$0xff]
    %v120 = vld [vmem:[#allocation3 + $0x230] sm:$0xff]
    %v121 = vld [vmem:[#allocation3 + $0x238] sm:$0xff]
    %s122 = scalar_lea.vmem [#allocation3], 576
    %v123 = vld [vmem:[%s122] ss:$8 sm:$0xf]
    %v124 = vld [vmem:[%s0] sm:$0xff]
    %v125 = vld [vmem:[%s0 + $0x8] sm:$0xff]
    %v126 = vld [vmem:[%s0 + $0x10] sm:$0xff]
    %v127 = vld [vmem:[%s0 + $0x18] sm:$0xff]
    %v128 = vld [vmem:[%s0 + $0x20] sm:$0xff]
    %v129 = vld [vmem:[%s0 + $0x28] sm:$0xff]
    %v130 = vld [vmem:[%s0 + $0x30] sm:$0xff]
    %v131 = vld [vmem:[%s0 + $0x38] sm:$0xff]
    %v132 = vld [vmem:[%s0 + $0x40] sm:$0xff]
    %v134 = vperm.slane %v123, 0
    %v135 = vperm.slane %v123, 1
    %v136 = vperm.slane %v123, 2
    %v137 = vperm.slane %v123, 3
    %vm142 = vcmask 130048
    %v144 = vsel %vm142, %v124, 0
    %v147 = vsel %vm142, %v125, 0
    %v150 = vsel %vm142, %v126, 0
    %v153 = vsel %vm142, %v127, 0
    %v156 = vsel %vm142, %v128, 0
    %v159 = vsel %vm142, %v129, 0
    %v162 = vsel %vm142, %v130, 0
    %v165 = vsel %vm142, %v131, 0
    %v168 = vsel %vm142, %v132, 0
    %170 = vmatpush.msra.mxu0 0.0
    %171 = vmatpush.msra.mxu0 0.0
    %172 = vmatpush.msra.mxu0 0.0
    %173 = vmatpush.msra.mxu0 0.0
    %174 = vmatpush.msra.mxu0 0.0
    %175 = vmatpush.msra.mxu0 0.0
    %176 = vmatpush.msra.mxu0 0.0
    %177 = vmatpush.msra.mxu0 0.0
    %178 = vmatpush.msra.mxu0 0.0
    %179 = vmatpush.msra.mxu0 0.0
    %180 = vmatpush.msra.mxu0 0.0
    %181 = vmatpush.msra.mxu0 0.0
    %182 = vmatpush.msra.mxu0 0.0
    %183 = vmatpush.msra.mxu0 0.0
    %184 = vmatpush.msra.mxu0 %v54
    %185 = vmatpush.msra.mxu0 %v50
    %186 = vmatmul.f32.gmra.mxu0 %v144
    %v187 = vpop.f32.mrf.mxu0
    %v188 = vadd.f32 %v134, %v187
    %189 = vmatmul.f32.gmra.mxu0 %v147
    %v190 = vpop.f32.mrf.mxu0
    %v191 = vadd.f32 %v134, %v190
    %192 = vmatmul.f32.gmra.mxu0 %v150
    %v193 = vpop.f32.mrf.mxu0
    %v194 = vadd.f32 %v134, %v193
    %195 = vmatmul.f32.gmra.mxu0 %v153
    %v196 = vpop.f32.mrf.mxu0
    %v197 = vadd.f32 %v134, %v196
    %198 = vmatmul.f32.gmra.mxu0 %v156
    %v199 = vpop.f32.mrf.mxu0
    %v200 = vadd.f32 %v134, %v199
    %201 = vmatmul.f32.gmra.mxu0 %v159
    %v202 = vpop.f32.mrf.mxu0
    %v203 = vadd.f32 %v134, %v202
    %204 = vmatmul.f32.gmra.mxu0 %v162
    %v205 = vpop.f32.mrf.mxu0
    %v206 = vadd.f32 %v134, %v205
    %207 = vmatmul.f32.gmra.mxu0 %v165
    %v208 = vpop.f32.mrf.mxu0
    %v209 = vadd.f32 %v134, %v208
    %210 = vmatmul.f32.gmra.mxu0 %v168
    %v211 = vpop.f32.mrf.mxu0
    %v212 = vadd.f32 %v134, %v211
    %213 = vdwg.mxu0
    %214 = vmatpush.msra.mxu0 0.0
    %215 = vmatpush.msra.mxu0 0.0
    %216 = vmatpush.msra.mxu0 0.0
    %217 = vmatpush.msra.mxu0 0.0
    %218 = vmatpush.msra.mxu0 0.0
    %219 = vmatpush.msra.mxu0 0.0
    %220 = vmatpush.msra.mxu0 0.0
    %221 = vmatpush.msra.mxu0 0.0
    %222 = vmatpush.msra.mxu0 0.0
    %223 = vmatpush.msra.mxu0 0.0
    %224 = vmatpush.msra.mxu0 0.0
    %225 = vmatpush.msra.mxu0 0.0
    %226 = vmatpush.msra.mxu0 0.0
    %227 = vmatpush.msra.mxu0 0.0
    %228 = vmatpush.msra.mxu0 %v55
    %229 = vmatpush.msra.mxu0 %v51
    %230 = vmatmul.f32.gmra.mxu0 %v144
    %v231 = vpop.f32.mrf.mxu0
    %v232 = vadd.f32 %v135, %v231
    %233 = vmatmul.f32.gmra.mxu0 %v147
    %v234 = vpop.f32.mrf.mxu0
    %v235 = vadd.f32 %v135, %v234
    %236 = vmatmul.f32.gmra.mxu0 %v150
    %v237 = vpop.f32.mrf.mxu0
    %v238 = vadd.f32 %v135, %v237
    %239 = vmatmul.f32.gmra.mxu0 %v153
    %v240 = vpop.f32.mrf.mxu0
    %v241 = vadd.f32 %v135, %v240
    %242 = vmatmul.f32.gmra.mxu0 %v156
    %v243 = vpop.f32.mrf.mxu0
    %v244 = vadd.f32 %v135, %v243
    %245 = vmatmul.f32.gmra.mxu0 %v159
    %v246 = vpop.f32.mrf.mxu0
    %v247 = vadd.f32 %v135, %v246
    %248 = vmatmul.f32.gmra.mxu0 %v162
    %v249 = vpop.f32.mrf.mxu0
    %v250 = vadd.f32 %v135, %v249
    %251 = vmatmul.f32.gmra.mxu0 %v165
    %v252 = vpop.f32.mrf.mxu0
    %v253 = vadd.f32 %v135, %v252
    %254 = vmatmul.f32.gmra.mxu0 %v168
    %v255 = vpop.f32.mrf.mxu0
    %v256 = vadd.f32 %v135, %v255
    %257 = vdwg.mxu0
    %258 = vmatpush.msra.mxu0 0.0
    %259 = vmatpush.msra.mxu0 0.0
    %260 = vmatpush.msra.mxu0 0.0
    %261 = vmatpush.msra.mxu0 0.0
    %262 = vmatpush.msra.mxu0 0.0
    %263 = vmatpush.msra.mxu0 0.0
    %264 = vmatpush.msra.mxu0 0.0
    %265 = vmatpush.msra.mxu0 0.0
    %266 = vmatpush.msra.mxu0 0.0
    %267 = vmatpush.msra.mxu0 0.0
    %268 = vmatpush.msra.mxu0 0.0
    %269 = vmatpush.msra.mxu0 0.0
    %270 = vmatpush.msra.mxu0 0.0
    %271 = vmatpush.msra.mxu0 0.0
    %272 = vmatpush.msra.mxu0 %v56
    %273 = vmatpush.msra.mxu0 %v52
    %274 = vmatmul.f32.gmra.mxu0 %v144
    %v275 = vpop.f32.mrf.mxu0
    %v276 = vadd.f32 %v136, %v275
    %277 = vmatmul.f32.gmra.mxu0 %v147
    %v278 = vpop.f32.mrf.mxu0
    %v279 = vadd.f32 %v136, %v278
    %280 = vmatmul.f32.gmra.mxu0 %v150
    %v281 = vpop.f32.mrf.mxu0
    %v282 = vadd.f32 %v136, %v281
    %283 = vmatmul.f32.gmra.mxu0 %v153
    %v284 = vpop.f32.mrf.mxu0
    %v285 = vadd.f32 %v136, %v284
    %286 = vmatmul.f32.gmra.mxu0 %v156
    %v287 = vpop.f32.mrf.mxu0
    %v288 = vadd.f32 %v136, %v287
    %289 = vmatmul.f32.gmra.mxu0 %v159
    %v290 = vpop.f32.mrf.mxu0
    %v291 = vadd.f32 %v136, %v290
    %292 = vmatmul.f32.gmra.mxu0 %v162
    %v293 = vpop.f32.mrf.mxu0
    %v294 = vadd.f32 %v136, %v293
    %295 = vmatmul.f32.gmra.mxu0 %v165
    %v296 = vpop.f32.mrf.mxu0
    %v297 = vadd.f32 %v136, %v296
    %298 = vmatmul.f32.gmra.mxu0 %v168
    %v299 = vpop.f32.mrf.mxu0
    %v300 = vadd.f32 %v136, %v299
    %301 = vdwg.mxu0
    %302 = vmatpush.msra.mxu0 0.0
    %303 = vmatpush.msra.mxu0 0.0
    %304 = vmatpush.msra.mxu0 0.0
    %305 = vmatpush.msra.mxu0 0.0
    %306 = vmatpush.msra.mxu0 0.0
    %307 = vmatpush.msra.mxu0 0.0
    %308 = vmatpush.msra.mxu0 0.0
    %309 = vmatpush.msra.mxu0 0.0
    %310 = vmatpush.msra.mxu0 0.0
    %311 = vmatpush.msra.mxu0 0.0
    %312 = vmatpush.msra.mxu0 0.0
    %313 = vmatpush.msra.mxu0 0.0
    %314 = vmatpush.msra.mxu0 0.0
    %315 = vmatpush.msra.mxu0 0.0
    %316 = vmatpush.msra.mxu0 %v57
    %317 = vmatpush.msra.mxu0 %v53
    %318 = vmatmul.f32.gmra.mxu0 %v144
    %v319 = vpop.f32.mrf.mxu0
    %v320 = vadd.f32 %v137, %v319
    %321 = vmatmul.f32.gmra.mxu0 %v147
    %v322 = vpop.f32.mrf.mxu0
    %v323 = vadd.f32 %v137, %v322
    %324 = vmatmul.f32.gmra.mxu0 %v150
    %v325 = vpop.f32.mrf.mxu0
    %v326 = vadd.f32 %v137, %v325
    %327 = vmatmul.f32.gmra.mxu0 %v153
    %v328 = vpop.f32.mrf.mxu0
    %v329 = vadd.f32 %v137, %v328
    %330 = vmatmul.f32.gmra.mxu0 %v156
    %v331 = vpop.f32.mrf.mxu0
    %v332 = vadd.f32 %v137, %v331
    %333 = vmatmul.f32.gmra.mxu0 %v159
    %v334 = vpop.f32.mrf.mxu0
    %v335 = vadd.f32 %v137, %v334
    %336 = vmatmul.f32.gmra.mxu0 %v162
    %v337 = vpop.f32.mrf.mxu0
    %v338 = vadd.f32 %v137, %v337
    %339 = vmatmul.f32.gmra.mxu0 %v165
    %v340 = vpop.f32.mrf.mxu0
    %v341 = vadd.f32 %v137, %v340
    %342 = vmatmul.f32.gmra.mxu0 %v168
    %v343 = vpop.f32.mrf.mxu0
    %v344 = vadd.f32 %v137, %v343
    %345 = vdwg.mxu0
    %v346 = vld [vmem:[#allocation6 + $0xc8] sm:$0x1]
    %347 = vmatpush.msra.mxu0 %v118
    %348 = vmatpush.msra.mxu0 %v114
    %349 = vmatpush.msra.mxu0 %v110
    %350 = vmatpush.msra.mxu0 %v106
    %351 = vmatpush.msra.mxu0 %v102
    %352 = vmatpush.msra.mxu0 %v98
    %353 = vmatpush.msra.mxu0 %v94
    %354 = vmatpush.msra.mxu0 %v90
    %355 = vmatpush.msra.mxu0 %v86
    %356 = vmatpush.msra.mxu0 %v82
    %357 = vmatpush.msra.mxu0 %v78
    %358 = vmatpush.msra.mxu0 %v74
    %359 = vmatpush.msra.mxu0 %v70
    %360 = vmatpush.msra.mxu0 %v66
    %361 = vmatpush.msra.mxu0 %v62
    %362 = vmatpush.msra.mxu0 %v58
    %363 = vmatmul.f32.gmra.mxu0 0.0
    %v364 = vpop.f32.mrf.mxu0
    %v365 = vadd.f32 0.0, %v364
    %366 = vdwg.mxu0
    %367 = vmatpush.msra.mxu0 %v119
    %368 = vmatpush.msra.mxu0 %v115
    %369 = vmatpush.msra.mxu0 %v111
    %370 = vmatpush.msra.mxu0 %v107
    %371 = vmatpush.msra.mxu0 %v103
    %372 = vmatpush.msra.mxu0 %v99
    %373 = vmatpush.msra.mxu0 %v95
    %374 = vmatpush.msra.mxu0 %v91
    %375 = vmatpush.msra.mxu0 %v87
    %376 = vmatpush.msra.mxu0 %v83
    %377 = vmatpush.msra.mxu0 %v79
    %378 = vmatpush.msra.mxu0 %v75
    %379 = vmatpush.msra.mxu0 %v71
    %380 = vmatpush.msra.mxu0 %v67
    %381 = vmatpush.msra.mxu0 %v63
    %382 = vmatpush.msra.mxu0 %v59
    %383 = vmatmul.f32.gmra.mxu0 0.0
    %v384 = vpop.f32.mrf.mxu0
    %v385 = vadd.f32 0.0, %v384
    %386 = vdwg.mxu0
    %387 = vmatpush.msra.mxu0 %v120
    %388 = vmatpush.msra.mxu0 %v116
    %389 = vmatpush.msra.mxu0 %v112
    %390 = vmatpush.msra.mxu0 %v108
    %391 = vmatpush.msra.mxu0 %v104
    %392 = vmatpush.msra.mxu0 %v100
    %393 = vmatpush.msra.mxu0 %v96
    %394 = vmatpush.msra.mxu0 %v92
    %395 = vmatpush.msra.mxu0 %v88
    %396 = vmatpush.msra.mxu0 %v84
    %397 = vmatpush.msra.mxu0 %v80
    %398 = vmatpush.msra.mxu0 %v76
    %399 = vmatpush.msra.mxu0 %v72
    %400 = vmatpush.msra.mxu0 %v68
    %401 = vmatpush.msra.mxu0 %v64
    %402 = vmatpush.msra.mxu0 %v60
    %403 = vmatmul.f32.gmra.mxu0 0.0
    %v404 = vpop.f32.mrf.mxu0
    %v405 = vadd.f32 0.0, %v404
    %406 = vdwg.mxu0
    %407 = vmatpush.msra.mxu0 %v121
    %408 = vmatpush.msra.mxu0 %v117
    %409 = vmatpush.msra.mxu0 %v113
    %410 = vmatpush.msra.mxu0 %v109
    %411 = vmatpush.msra.mxu0 %v105
    %412 = vmatpush.msra.mxu0 %v101
    %413 = vmatpush.msra.mxu0 %v97
    %414 = vmatpush.msra.mxu0 %v93
    %415 = vmatpush.msra.mxu0 %v89
    %416 = vmatpush.msra.mxu0 %v85
    %417 = vmatpush.msra.mxu0 %v81
    %418 = vmatpush.msra.mxu0 %v77
    %419 = vmatpush.msra.mxu0 %v73
    %420 = vmatpush.msra.mxu0 %v69
    %421 = vmatpush.msra.mxu0 %v65
    %422 = vmatpush.msra.mxu0 %v61
    %423 = vmatmul.f32.gmra.mxu0 0.0
    %v424 = vpop.f32.mrf.mxu0
    %v425 = vadd.f32 0.0, %v424
    %426 = vdwg.mxu0
    %v427 = vadd.f32 %v188, %v365
    %v428 = vadd.f32 %v232, %v385
    %v429 = vadd.f32 %v276, %v405
    %v430 = vadd.f32 %v320, %v425
    %v431 = vmul.f32 %v427, 0.5
    %v432 = vmul.f32 %v428, 0.5
    %v433 = vmul.f32 %v429, 0.5
    %v434 = vtanh.pop %v431
    %v435 = vtanh.pop %v432
    %v436 = vtanh.pop %v433
    %v437 = vmul.f32 %v434, 0.5
    %v438 = vmul.f32 %v435, 0.5
    %v439 = vmul.f32 %v436, 0.5
    %v440 = vadd.f32 %v437, 0.5
    %v441 = vadd.f32 %v438, 0.5
    %v442 = vadd.f32 %v439, 0.5
    %v443 = vtanh.pop %v430
    %v444 = vmul.f32 %v441, 0.0
    %v445 = vmul.f32 %v440, %v443
    %v446 = vadd.f32 %v444, %v445
    %v447 = vperm.slane %v346, 0
    %v448 = vmul.f32 %v446, %v447
    %v449 = vtanh.pop %v448
    %v450 = vmul.f32 %v442, %v449
    %451 = vmatpush.msra.mxu0 %v118
    %452 = vmatpush.msra.mxu0 %v114
    %453 = vmatpush.msra.mxu0 %v110
    %454 = vmatpush.msra.mxu0 %v106
    %455 = vmatpush.msra.mxu0 %v102
    %456 = vmatpush.msra.mxu0 %v98
    %457 = vmatpush.msra.mxu0 %v94
    %458 = vmatpush.msra.mxu0 %v90
    %459 = vmatpush.msra.mxu0 %v86
    %460 = vmatpush.msra.mxu0 %v82
    %461 = vmatpush.msra.mxu0 %v78
    %462 = vmatpush.msra.mxu0 %v74
    %463 = vmatpush.msra.mxu0 %v70
    %464 = vmatpush.msra.mxu0 %v66
    %465 = vmatpush.msra.mxu0 %v62
    %466 = vmatpush.msra.mxu0 %v58
    %467 = vmatmul.f32.gmra.mxu0 %v450
    %v468 = vpop.f32.mrf.mxu0
    %v469 = vadd.f32 0.0, %v468
    %470 = vdwg.mxu0
    %471 = vmatpush.msra.mxu0 %v119
    %472 = vmatpush.msra.mxu0 %v115
    %473 = vmatpush.msra.mxu0 %v111
    %474 = vmatpush.msra.mxu0 %v107
    %475 = vmatpush.msra.mxu0 %v103
    %476 = vmatpush.msra.mxu0 %v99
    %477 = vmatpush.msra.mxu0 %v95
    %478 = vmatpush.msra.mxu0 %v91
    %479 = vmatpush.msra.mxu0 %v87
    %480 = vmatpush.msra.mxu0 %v83
    %481 = vmatpush.msra.mxu0 %v79
    %482 = vmatpush.msra.mxu0 %v75
    %483 = vmatpush.msra.mxu0 %v71
    %484 = vmatpush.msra.mxu0 %v67
    %485 = vmatpush.msra.mxu0 %v63
    %486 = vmatpush.msra.mxu0 %v59
    %487 = vmatmul.f32.gmra.mxu0 %v450
    %v488 = vpop.f32.mrf.mxu0
    %v489 = vadd.f32 0.0, %v488
    %490 = vdwg.mxu0
    %491 = vmatpush.msra.mxu0 %v120
    %492 = vmatpush.msra.mxu0 %v116
    %493 = vmatpush.msra.mxu0 %v112
    %494 = vmatpush.msra.mxu0 %v108
    %495 = vmatpush.msra.mxu0 %v104
    %496 = vmatpush.msra.mxu0 %v100
    %497 = vmatpush.msra.mxu0 %v96
    %498 = vmatpush.msra.mxu0 %v92
    %499 = vmatpush.msra.mxu0 %v88
    %500 = vmatpush.msra.mxu0 %v84
    %501 = vmatpush.msra.mxu0 %v80
    %502 = vmatpush.msra.mxu0 %v76
    %503 = vmatpush.msra.mxu0 %v72
    %504 = vmatpush.msra.mxu0 %v68
    %505 = vmatpush.msra.mxu0 %v64
    %506 = vmatpush.msra.mxu0 %v60
    %507 = vmatmul.f32.gmra.mxu0 %v450
    %v508 = vpop.f32.mrf.mxu0
    %v509 = vadd.f32 0.0, %v508
    %510 = vdwg.mxu0
    %511 = vmatpush.msra.mxu0 %v121
    %512 = vmatpush.msra.mxu0 %v117
    %513 = vmatpush.msra.mxu0 %v113
    %514 = vmatpush.msra.mxu0 %v109
    %515 = vmatpush.msra.mxu0 %v105
    %516 = vmatpush.msra.mxu0 %v101
    %517 = vmatpush.msra.mxu0 %v97
    %518 = vmatpush.msra.mxu0 %v93
    %519 = vmatpush.msra.mxu0 %v89
    %520 = vmatpush.msra.mxu0 %v85
    %521 = vmatpush.msra.mxu0 %v81
    %522 = vmatpush.msra.mxu0 %v77
    %523 = vmatpush.msra.mxu0 %v73
    %524 = vmatpush.msra.mxu0 %v69
    %525 = vmatpush.msra.mxu0 %v65
    %526 = vmatpush.msra.mxu0 %v61
    %527 = vmatmul.f32.gmra.mxu0 %v450
    %v528 = vpop.f32.mrf.mxu0
    %v529 = vadd.f32 0.0, %v528
    %530 = vdwg.mxu0
    %v531 = vadd.f32 %v191, %v469
    %v532 = vadd.f32 %v235, %v489
    %v533 = vadd.f32 %v279, %v509
    %v534 = vadd.f32 %v323, %v529
    %v535 = vmul.f32 %v531, 0.5
    %v536 = vmul.f32 %v532, 0.5
    %v537 = vmul.f32 %v533, 0.5
    %v538 = vtanh.pop %v535
    %v539 = vtanh.pop %v536
    %v540 = vtanh.pop %v537
    %v541 = vmul.f32 %v538, 0.5
    %v542 = vmul.f32 %v539, 0.5
    %v543 = vmul.f32 %v540, 0.5
    %v544 = vadd.f32 %v541, 0.5
    %v545 = vadd.f32 %v542, 0.5
    %v546 = vadd.f32 %v543, 0.5
    %v547 = vtanh.pop %v534
    %v548 = vmul.f32 %v545, %v448
    %v549 = vmul.f32 %v544, %v547
    %v550 = vadd.f32 %v548, %v549
    %v551 = vtanh.pop %v550
    %v552 = vmul.f32 %v546, %v551
    %553 = vst [vmem:[#allocation2] sm:$0xff] %v552
    %554 = vmatpush.msra.mxu0 %v118
    %555 = vmatpush.msra.mxu0 %v114
    %556 = vmatpush.msra.mxu0 %v110
    %557 = vmatpush.msra.mxu0 %v106
    %558 = vmatpush.msra.mxu0 %v102
    %559 = vmatpush.msra.mxu0 %v98
    %560 = vmatpush.msra.mxu0 %v94
    %561 = vmatpush.msra.mxu0 %v90
    %562 = vmatpush.msra.mxu0 %v86
    %563 = vmatpush.msra.mxu0 %v82
    %564 = vmatpush.msra.mxu0 %v78
    %565 = vmatpush.msra.mxu0 %v74
    %566 = vmatpush.msra.mxu0 %v70
    %567 = vmatpush.msra.mxu0 %v66
    %568 = vmatpush.msra.mxu0 %v62
    %569 = vmatpush.msra.mxu0 %v58
    %570 = vmatmul.f32.gmra.mxu0 %v552
    %v571 = vpop.f32.mrf.mxu0
    %v572 = vadd.f32 0.0, %v571
    %573 = vdwg.mxu0
    %574 = vmatpush.msra.mxu0 %v119
    %575 = vmatpush.msra.mxu0 %v115
    %576 = vmatpush.msra.mxu0 %v111
    %577 = vmatpush.msra.mxu0 %v107
    %578 = vmatpush.msra.mxu0 %v103
    %579 = vmatpush.msra.mxu0 %v99
    %580 = vmatpush.msra.mxu0 %v95
    %581 = vmatpush.msra.mxu0 %v91
    %582 = vmatpush.msra.mxu0 %v87
    %583 = vmatpush.msra.mxu0 %v83
    %584 = vmatpush.msra.mxu0 %v79
    %585 = vmatpush.msra.mxu0 %v75
    %586 = vmatpush.msra.mxu0 %v71
    %587 = vmatpush.msra.mxu0 %v67
    %588 = vmatpush.msra.mxu0 %v63
    %589 = vmatpush.msra.mxu0 %v59
    %590 = vmatmul.f32.gmra.mxu0 %v552
    %v591 = vpop.f32.mrf.mxu0
    %v592 = vadd.f32 0.0, %v591
    %593 = vdwg.mxu0
    %594 = vmatpush.msra.mxu0 %v120
    %595 = vmatpush.msra.mxu0 %v116
    %596 = vmatpush.msra.mxu0 %v112
    %597 = vmatpush.msra.mxu0 %v108
    %598 = vmatpush.msra.mxu0 %v104
    %599 = vmatpush.msra.mxu0 %v100
    %600 = vmatpush.msra.mxu0 %v96
    %601 = vmatpush.msra.mxu0 %v92
    %602 = vmatpush.msra.mxu0 %v88
    %603 = vmatpush.msra.mxu0 %v84
    %604 = vmatpush.msra.mxu0 %v80
    %605 = vmatpush.msra.mxu0 %v76
    %606 = vmatpush.msra.mxu0 %v72
    %607 = vmatpush.msra.mxu0 %v68
    %608 = vmatpush.msra.mxu0 %v64
    %609 = vmatpush.msra.mxu0 %v60
    %610 = vmatmul.f32.gmra.mxu0 %v552
    %v611 = vpop.f32.mrf.mxu0
    %v612 = vadd.f32 0.0, %v611
    %613 = vdwg.mxu0
    %614 = vmatpush.msra.mxu0 %v121
    %615 = vmatpush.msra.mxu0 %v117
    %616 = vmatpush.msra.mxu0 %v113
    %617 = vmatpush.msra.mxu0 %v109
    %618 = vmatpush.msra.mxu0 %v105
    %619 = vmatpush.msra.mxu0 %v101
    %620 = vmatpush.msra.mxu0 %v97
    %621 = vmatpush.msra.mxu0 %v93
    %622 = vmatpush.msra.mxu0 %v89
    %623 = vmatpush.msra.mxu0 %v85
    %624 = vmatpush.msra.mxu0 %v81
    %625 = vmatpush.msra.mxu0 %v77
    %626 = vmatpush.msra.mxu0 %v73
    %627 = vmatpush.msra.mxu0 %v69
    %628 = vmatpush.msra.mxu0 %v65
    %629 = vmatpush.msra.mxu0 %v61
    %630 = vmatmul.f32.gmra.mxu0 %v552
    %v631 = vpop.f32.mrf.mxu0
    %v632 = vadd.f32 0.0, %v631
    %633 = vdwg.mxu0
    %v634 = vadd.f32 %v194, %v572
    %v635 = vadd.f32 %v238, %v592
    %v636 = vadd.f32 %v282, %v612
    %v637 = vadd.f32 %v326, %v632
    %v638 = vmul.f32 %v634, 0.5
    %v639 = vmul.f32 %v635, 0.5
    %v640 = vmul.f32 %v636, 0.5
    %v641 = vtanh.pop %v638
    %v642 = vtanh.pop %v639
    %v643 = vtanh.pop %v640
    %v644 = vmul.f32 %v641, 0.5
    %v645 = vmul.f32 %v642, 0.5
    %v646 = vmul.f32 %v643, 0.5
    %v647 = vadd.f32 %v644, 0.5
    %v648 = vadd.f32 %v645, 0.5
    %v649 = vadd.f32 %v646, 0.5
    %v650 = vtanh.pop %v637
    %v651 = vmul.f32 %v648, %v550
    %v652 = vmul.f32 %v647, %v650
    %v653 = vadd.f32 %v651, %v652
    %v654 = vtanh.pop %v653
    %v655 = vmul.f32 %v649, %v654
    %656 = vst [vmem:[#allocation2 + $0x8] sm:$0xff] %v655
    %657 = vmatpush.msra.mxu0 %v118
    %658 = vmatpush.msra.mxu0 %v114
    %659 = vmatpush.msra.mxu0 %v110
    %660 = vmatpush.msra.mxu0 %v106
    %661 = vmatpush.msra.mxu0 %v102
    %662 = vmatpush.msra.mxu0 %v98
    %663 = vmatpush.msra.mxu0 %v94
    %664 = vmatpush.msra.mxu0 %v90
    %665 = vmatpush.msra.mxu0 %v86
    %666 = vmatpush.msra.mxu0 %v82
    %667 = vmatpush.msra.mxu0 %v78
    %668 = vmatpush.msra.mxu0 %v74
    %669 = vmatpush.msra.mxu0 %v70
    %670 = vmatpush.msra.mxu0 %v66
    %671 = vmatpush.msra.mxu0 %v62
    %672 = vmatpush.msra.mxu0 %v58
    %673 = vmatmul.f32.gmra.mxu0 %v655
    %v674 = vpop.f32.mrf.mxu0
    %v675 = vadd.f32 0.0, %v674
    %676 = vdwg.mxu0
    %677 = vmatpush.msra.mxu0 %v119
    %678 = vmatpush.msra.mxu0 %v115
    %679 = vmatpush.msra.mxu0 %v111
    %680 = vmatpush.msra.mxu0 %v107
    %681 = vmatpush.msra.mxu0 %v103
    %682 = vmatpush.msra.mxu0 %v99
    %683 = vmatpush.msra.mxu0 %v95
    %684 = vmatpush.msra.mxu0 %v91
    %685 = vmatpush.msra.mxu0 %v87
    %686 = vmatpush.msra.mxu0 %v83
    %687 = vmatpush.msra.mxu0 %v79
    %688 = vmatpush.msra.mxu0 %v75
    %689 = vmatpush.msra.mxu0 %v71
    %690 = vmatpush.msra.mxu0 %v67
    %691 = vmatpush.msra.mxu0 %v63
    %692 = vmatpush.msra.mxu0 %v59
    %693 = vmatmul.f32.gmra.mxu0 %v655
    %v694 = vpop.f32.mrf.mxu0
    %v695 = vadd.f32 0.0, %v694
    %696 = vdwg.mxu0
    %697 = vmatpush.msra.mxu0 %v120
    %698 = vmatpush.msra.mxu0 %v116
    %699 = vmatpush.msra.mxu0 %v112
    %700 = vmatpush.msra.mxu0 %v108
    %701 = vmatpush.msra.mxu0 %v104
    %702 = vmatpush.msra.mxu0 %v100
    %703 = vmatpush.msra.mxu0 %v96
    %704 = vmatpush.msra.mxu0 %v92
    %705 = vmatpush.msra.mxu0 %v88
    %706 = vmatpush.msra.mxu0 %v84
    %707 = vmatpush.msra.mxu0 %v80
    %708 = vmatpush.msra.mxu0 %v76
    %709 = vmatpush.msra.mxu0 %v72
    %710 = vmatpush.msra.mxu0 %v68
    %711 = vmatpush.msra.mxu0 %v64
    %712 = vmatpush.msra.mxu0 %v60
    %713 = vmatmul.f32.gmra.mxu0 %v655
    %v714 = vpop.f32.mrf.mxu0
    %v715 = vadd.f32 0.0, %v714
    %716 = vdwg.mxu0
    %717 = vmatpush.msra.mxu0 %v121
    %718 = vmatpush.msra.mxu0 %v117
    %719 = vmatpush.msra.mxu0 %v113
    %720 = vmatpush.msra.mxu0 %v109
    %721 = vmatpush.msra.mxu0 %v105
    %722 = vmatpush.msra.mxu0 %v101
    %723 = vmatpush.msra.mxu0 %v97
    %724 = vmatpush.msra.mxu0 %v93
    %725 = vmatpush.msra.mxu0 %v89
    %726 = vmatpush.msra.mxu0 %v85
    %727 = vmatpush.msra.mxu0 %v81
    %728 = vmatpush.msra.mxu0 %v77
    %729 = vmatpush.msra.mxu0 %v73
    %730 = vmatpush.msra.mxu0 %v69
    %731 = vmatpush.msra.mxu0 %v65
    %732 = vmatpush.msra.mxu0 %v61
    %733 = vmatmul.f32.gmra.mxu0 %v655
    %v734 = vpop.f32.mrf.mxu0
    %v735 = vadd.f32 0.0, %v734
    %736 = vdwg.mxu0
    %v737 = vadd.f32 %v197, %v675
    %v738 = vadd.f32 %v241, %v695
    %v739 = vadd.f32 %v285, %v715
    %v740 = vadd.f32 %v329, %v735
    %v741 = vmul.f32 %v737, 0.5
    %v742 = vmul.f32 %v738, 0.5
    %v743 = vmul.f32 %v739, 0.5
    %v744 = vtanh.pop %v741
    %v745 = vtanh.pop %v742
    %v746 = vtanh.pop %v743
    %v747 = vmul.f32 %v744, 0.5
    %v748 = vmul.f32 %v745, 0.5
    %v749 = vmul.f32 %v746, 0.5
    %v750 = vadd.f32 %v747, 0.5
    %v751 = vadd.f32 %v748, 0.5
    %v752 = vadd.f32 %v749, 0.5
    %v753 = vtanh.pop %v740
    %v754 = vmul.f32 %v751, %v653
    %v755 = vmul.f32 %v750, %v753
    %v756 = vadd.f32 %v754, %v755
    %v757 = vtanh.pop %v756
    %v758 = vmul.f32 %v752, %v757
    %759 = vst [vmem:[#allocation2 + $0x10] sm:$0xff] %v758
    %760 = vmatpush.msra.mxu0 %v118
    %761 = vmatpush.msra.mxu0 %v114
    %762 = vmatpush.msra.mxu0 %v110
    %763 = vmatpush.msra.mxu0 %v106
    %764 = vmatpush.msra.mxu0 %v102
    %765 = vmatpush.msra.mxu0 %v98
    %766 = vmatpush.msra.mxu0 %v94
    %767 = vmatpush.msra.mxu0 %v90
    %768 = vmatpush.msra.mxu0 %v86
    %769 = vmatpush.msra.mxu0 %v82
    %770 = vmatpush.msra.mxu0 %v78
    %771 = vmatpush.msra.mxu0 %v74
    %772 = vmatpush.msra.mxu0 %v70
    %773 = vmatpush.msra.mxu0 %v66
    %774 = vmatpush.msra.mxu0 %v62
    %775 = vmatpush.msra.mxu0 %v58
    %776 = vmatmul.f32.gmra.mxu0 %v758
    %v777 = vpop.f32.mrf.mxu0
    %v778 = vadd.f32 0.0, %v777
    %779 = vdwg.mxu0
    %780 = vmatpush.msra.mxu0 %v119
    %781 = vmatpush.msra.mxu0 %v115
    %782 = vmatpush.msra.mxu0 %v111
    %783 = vmatpush.msra.mxu0 %v107
    %784 = vmatpush.msra.mxu0 %v103
    %785 = vmatpush.msra.mxu0 %v99
    %786 = vmatpush.msra.mxu0 %v95
    %787 = vmatpush.msra.mxu0 %v91
    %788 = vmatpush.msra.mxu0 %v87
    %789 = vmatpush.msra.mxu0 %v83
    %790 = vmatpush.msra.mxu0 %v79
    %791 = vmatpush.msra.mxu0 %v75
    %792 = vmatpush.msra.mxu0 %v71
    %793 = vmatpush.msra.mxu0 %v67
    %794 = vmatpush.msra.mxu0 %v63
    %795 = vmatpush.msra.mxu0 %v59
    %796 = vmatmul.f32.gmra.mxu0 %v758
    %v797 = vpop.f32.mrf.mxu0
    %v798 = vadd.f32 0.0, %v797
    %799 = vdwg.mxu0
    %800 = vmatpush.msra.mxu0 %v120
    %801 = vmatpush.msra.mxu0 %v116
    %802 = vmatpush.msra.mxu0 %v112
    %803 = vmatpush.msra.mxu0 %v108
    %804 = vmatpush.msra.mxu0 %v104
    %805 = vmatpush.msra.mxu0 %v100
    %806 = vmatpush.msra.mxu0 %v96
    %807 = vmatpush.msra.mxu0 %v92
    %808 = vmatpush.msra.mxu0 %v88
    %809 = vmatpush.msra.mxu0 %v84
    %810 = vmatpush.msra.mxu0 %v80
    %811 = vmatpush.msra.mxu0 %v76
    %812 = vmatpush.msra.mxu0 %v72
    %813 = vmatpush.msra.mxu0 %v68
    %814 = vmatpush.msra.mxu0 %v64
    %815 = vmatpush.msra.mxu0 %v60
    %816 = vmatmul.f32.gmra.mxu0 %v758
    %v817 = vpop.f32.mrf.mxu0
    %v818 = vadd.f32 0.0, %v817
    %819 = vdwg.mxu0
    %820 = vmatpush.msra.mxu0 %v121
    %821 = vmatpush.msra.mxu0 %v117
    %822 = vmatpush.msra.mxu0 %v113
    %823 = vmatpush.msra.mxu0 %v109
    %824 = vmatpush.msra.mxu0 %v105
    %825 = vmatpush.msra.mxu0 %v101
    %826 = vmatpush.msra.mxu0 %v97
    %827 = vmatpush.msra.mxu0 %v93
    %828 = vmatpush.msra.mxu0 %v89
    %829 = vmatpush.msra.mxu0 %v85
    %830 = vmatpush.msra.mxu0 %v81
    %831 = vmatpush.msra.mxu0 %v77
    %832 = vmatpush.msra.mxu0 %v73
    %833 = vmatpush.msra.mxu0 %v69
    %834 = vmatpush.msra.mxu0 %v65
    %835 = vmatpush.msra.mxu0 %v61
    %836 = vmatmul.f32.gmra.mxu0 %v758
    %v837 = vpop.f32.mrf.mxu0
    %v838 = vadd.f32 0.0, %v837
    %839 = vdwg.mxu0
    %v840 = vadd.f32 %v200, %v778
    %v841 = vadd.f32 %v244, %v798
    %v842 = vadd.f32 %v288, %v818
    %v843 = vadd.f32 %v332, %v838
    %v844 = vmul.f32 %v840, 0.5
    %v845 = vmul.f32 %v841, 0.5
    %v846 = vmul.f32 %v842, 0.5
    %v847 = vtanh.pop %v844
    %v848 = vtanh.pop %v845
    %v849 = vtanh.pop %v846
    %v850 = vmul.f32 %v847, 0.5
    %v851 = vmul.f32 %v848, 0.5
    %v852 = vmul.f32 %v849, 0.5
    %v853 = vadd.f32 %v850, 0.5
    %v854 = vadd.f32 %v851, 0.5
    %v855 = vadd.f32 %v852, 0.5
    %v856 = vtanh.pop %v843
    %v857 = vmul.f32 %v854, %v756
    %v858 = vmul.f32 %v853, %v856
    %v859 = vadd.f32 %v857, %v858
    %v860 = vtanh.pop %v859
    %v861 = vmul.f32 %v855, %v860
    %862 = vst [vmem:[#allocation2 + $0x18] sm:$0xff] %v861
    %863 = vmatpush.msra.mxu0 %v118
    %864 = vmatpush.msra.mxu0 %v114
    %865 = vmatpush.msra.mxu0 %v110
    %866 = vmatpush.msra.mxu0 %v106
    %867 = vmatpush.msra.mxu0 %v102
    %868 = vmatpush.msra.mxu0 %v98
    %869 = vmatpush.msra.mxu0 %v94
    %870 = vmatpush.msra.mxu0 %v90
    %871 = vmatpush.msra.mxu0 %v86
    %872 = vmatpush.msra.mxu0 %v82
    %873 = vmatpush.msra.mxu0 %v78
    %874 = vmatpush.msra.mxu0 %v74
    %875 = vmatpush.msra.mxu0 %v70
    %876 = vmatpush.msra.mxu0 %v66
    %877 = vmatpush.msra.mxu0 %v62
    %878 = vmatpush.msra.mxu0 %v58
    %879 = vmatmul.f32.gmra.mxu0 %v861
    %v880 = vpop.f32.mrf.mxu0
    %v881 = vadd.f32 0.0, %v880
    %882 = vdwg.mxu0
    %883 = vmatpush.msra.mxu0 %v119
    %884 = vmatpush.msra.mxu0 %v115
    %885 = vmatpush.msra.mxu0 %v111
    %886 = vmatpush.msra.mxu0 %v107
    %887 = vmatpush.msra.mxu0 %v103
    %888 = vmatpush.msra.mxu0 %v99
    %889 = vmatpush.msra.mxu0 %v95
    %890 = vmatpush.msra.mxu0 %v91
    %891 = vmatpush.msra.mxu0 %v87
    %892 = vmatpush.msra.mxu0 %v83
    %893 = vmatpush.msra.mxu0 %v79
    %894 = vmatpush.msra.mxu0 %v75
    %895 = vmatpush.msra.mxu0 %v71
    %896 = vmatpush.msra.mxu0 %v67
    %897 = vmatpush.msra.mxu0 %v63
    %898 = vmatpush.msra.mxu0 %v59
    %899 = vmatmul.f32.gmra.mxu0 %v861
    %v900 = vpop.f32.mrf.mxu0
    %v901 = vadd.f32 0.0, %v900
    %902 = vdwg.mxu0
    %903 = vmatpush.msra.mxu0 %v120
    %904 = vmatpush.msra.mxu0 %v116
    %905 = vmatpush.msra.mxu0 %v112
    %906 = vmatpush.msra.mxu0 %v108
    %907 = vmatpush.msra.mxu0 %v104
    %908 = vmatpush.msra.mxu0 %v100
    %909 = vmatpush.msra.mxu0 %v96
    %910 = vmatpush.msra.mxu0 %v92
    %911 = vmatpush.msra.mxu0 %v88
    %912 = vmatpush.msra.mxu0 %v84
    %913 = vmatpush.msra.mxu0 %v80
    %914 = vmatpush.msra.mxu0 %v76
    %915 = vmatpush.msra.mxu0 %v72
    %916 = vmatpush.msra.mxu0 %v68
    %917 = vmatpush.msra.mxu0 %v64
    %918 = vmatpush.msra.mxu0 %v60
    %919 = vmatmul.f32.gmra.mxu0 %v861
    %v920 = vpop.f32.mrf.mxu0
    %v921 = vadd.f32 0.0, %v920
    %922 = vdwg.mxu0
    %923 = vmatpush.msra.mxu0 %v121
    %924 = vmatpush.msra.mxu0 %v117
    %925 = vmatpush.msra.mxu0 %v113
    %926 = vmatpush.msra.mxu0 %v109
    %927 = vmatpush.msra.mxu0 %v105
    %928 = vmatpush.msra.mxu0 %v101
    %929 = vmatpush.msra.mxu0 %v97
    %930 = vmatpush.msra.mxu0 %v93
    %931 = vmatpush.msra.mxu0 %v89
    %932 = vmatpush.msra.mxu0 %v85
    %933 = vmatpush.msra.mxu0 %v81
    %934 = vmatpush.msra.mxu0 %v77
    %935 = vmatpush.msra.mxu0 %v73
    %936 = vmatpush.msra.mxu0 %v69
    %937 = vmatpush.msra.mxu0 %v65
    %938 = vmatpush.msra.mxu0 %v61
    %939 = vmatmul.f32.gmra.mxu0 %v861
    %v940 = vpop.f32.mrf.mxu0
    %v941 = vadd.f32 0.0, %v940
    %942 = vdwg.mxu0
    %v943 = vadd.f32 %v203, %v881
    %v944 = vadd.f32 %v247, %v901
    %v945 = vadd.f32 %v291, %v921
    %v946 = vadd.f32 %v335, %v941
    %v947 = vmul.f32 %v943, 0.5
    %v948 = vmul.f32 %v944, 0.5
    %v949 = vmul.f32 %v945, 0.5
    %v950 = vtanh.pop %v947
    %v951 = vtanh.pop %v948
    %v952 = vtanh.pop %v949
    %v953 = vmul.f32 %v950, 0.5
    %v954 = vmul.f32 %v951, 0.5
    %v955 = vmul.f32 %v952, 0.5
    %v956 = vadd.f32 %v953, 0.5
    %v957 = vadd.f32 %v954, 0.5
    %v958 = vadd.f32 %v955, 0.5
    %v959 = vtanh.pop %v946
    %v960 = vmul.f32 %v957, %v859
    %v961 = vmul.f32 %v956, %v959
    %v962 = vadd.f32 %v960, %v961
    %v963 = vtanh.pop %v962
    %v964 = vmul.f32 %v958, %v963
    %965 = vst [vmem:[#allocation2 + $0x20] sm:$0xff] %v964
    %966 = vmatpush.msra.mxu0 %v118
    %967 = vmatpush.msra.mxu0 %v114
    %968 = vmatpush.msra.mxu0 %v110
    %969 = vmatpush.msra.mxu0 %v106
    %970 = vmatpush.msra.mxu0 %v102
    %971 = vmatpush.msra.mxu0 %v98
    %972 = vmatpush.msra.mxu0 %v94
    %973 = vmatpush.msra.mxu0 %v90
    %974 = vmatpush.msra.mxu0 %v86
    %975 = vmatpush.msra.mxu0 %v82
    %976 = vmatpush.msra.mxu0 %v78
    %977 = vmatpush.msra.mxu0 %v74
    %978 = vmatpush.msra.mxu0 %v70
    %979 = vmatpush.msra.mxu0 %v66
    %980 = vmatpush.msra.mxu0 %v62
    %981 = vmatpush.msra.mxu0 %v58
    %982 = vmatmul.f32.gmra.mxu0 %v964
    %v983 = vpop.f32.mrf.mxu0
    %v984 = vadd.f32 0.0, %v983
    %985 = vdwg.mxu0
    %986 = vmatpush.msra.mxu0 %v119
    %987 = vmatpush.msra.mxu0 %v115
    %988 = vmatpush.msra.mxu0 %v111
    %989 = vmatpush.msra.mxu0 %v107
    %990 = vmatpush.msra.mxu0 %v103
    %991 = vmatpush.msra.mxu0 %v99
    %992 = vmatpush.msra.mxu0 %v95
    %993 = vmatpush.msra.mxu0 %v91
    %994 = vmatpush.msra.mxu0 %v87
    %995 = vmatpush.msra.mxu0 %v83
    %996 = vmatpush.msra.mxu0 %v79
    %997 = vmatpush.msra.mxu0 %v75
    %998 = vmatpush.msra.mxu0 %v71
    %999 = vmatpush.msra.mxu0 %v67
    %1000 = vmatpush.msra.mxu0 %v63
    %1001 = vmatpush.msra.mxu0 %v59
    %1002 = vmatmul.f32.gmra.mxu0 %v964
    %v1003 = vpop.f32.mrf.mxu0
    %v1004 = vadd.f32 0.0, %v1003
    %1005 = vdwg.mxu0
    %1006 = vmatpush.msra.mxu0 %v120
    %1007 = vmatpush.msra.mxu0 %v116
    %1008 = vmatpush.msra.mxu0 %v112
    %1009 = vmatpush.msra.mxu0 %v108
    %1010 = vmatpush.msra.mxu0 %v104
    %1011 = vmatpush.msra.mxu0 %v100
    %1012 = vmatpush.msra.mxu0 %v96
    %1013 = vmatpush.msra.mxu0 %v92
    %1014 = vmatpush.msra.mxu0 %v88
    %1015 = vmatpush.msra.mxu0 %v84
    %1016 = vmatpush.msra.mxu0 %v80
    %1017 = vmatpush.msra.mxu0 %v76
    %1018 = vmatpush.msra.mxu0 %v72
    %1019 = vmatpush.msra.mxu0 %v68
    %1020 = vmatpush.msra.mxu0 %v64
    %1021 = vmatpush.msra.mxu0 %v60
    %1022 = vmatmul.f32.gmra.mxu0 %v964
    %v1023 = vpop.f32.mrf.mxu0
    %v1024 = vadd.f32 0.0, %v1023
    %1025 = vdwg.mxu0
    %1026 = vmatpush.msra.mxu0 %v121
    %1027 = vmatpush.msra.mxu0 %v117
    %1028 = vmatpush.msra.mxu0 %v113
    %1029 = vmatpush.msra.mxu0 %v109
    %1030 = vmatpush.msra.mxu0 %v105
    %1031 = vmatpush.msra.mxu0 %v101
    %1032 = vmatpush.msra.mxu0 %v97
    %1033 = vmatpush.msra.mxu0 %v93
    %1034 = vmatpush.msra.mxu0 %v89
    %1035 = vmatpush.msra.mxu0 %v85
    %1036 = vmatpush.msra.mxu0 %v81
    %1037 = vmatpush.msra.mxu0 %v77
    %1038 = vmatpush.msra.mxu0 %v73
    %1039 = vmatpush.msra.mxu0 %v69
    %1040 = vmatpush.msra.mxu0 %v65
    %1041 = vmatpush.msra.mxu0 %v61
    %1042 = vmatmul.f32.gmra.mxu0 %v964
    %v1043 = vpop.f32.mrf.mxu0
    %v1044 = vadd.f32 0.0, %v1043
    %1045 = vdwg.mxu0
    %v1046 = vadd.f32 %v206, %v984
    %v1047 = vadd.f32 %v250, %v1004
    %v1048 = vadd.f32 %v294, %v1024
    %v1049 = vadd.f32 %v338, %v1044
    %v1050 = vmul.f32 %v1046, 0.5
    %v1051 = vmul.f32 %v1047, 0.5
    %v1052 = vmul.f32 %v1048, 0.5
    %v1053 = vtanh.pop %v1050
    %v1054 = vtanh.pop %v1051
    %v1055 = vtanh.pop %v1052
    %v1056 = vmul.f32 %v1053, 0.5
    %v1057 = vmul.f32 %v1054, 0.5
    %v1058 = vmul.f32 %v1055, 0.5
    %v1059 = vadd.f32 %v1056, 0.5
    %v1060 = vadd.f32 %v1057, 0.5
    %v1061 = vadd.f32 %v1058, 0.5
    %v1062 = vtanh.pop %v1049
    %v1063 = vmul.f32 %v1060, %v962
    %v1064 = vmul.f32 %v1059, %v1062
    %v1065 = vadd.f32 %v1063, %v1064
    %v1066 = vtanh.pop %v1065
    %v1067 = vmul.f32 %v1061, %v1066
    %1068 = vst [vmem:[#allocation2 + $0x28] sm:$0xff] %v1067
    %1069 = vmatpush.msra.mxu0 %v118
    %1070 = vmatpush.msra.mxu0 %v114
    %1071 = vmatpush.msra.mxu0 %v110
    %1072 = vmatpush.msra.mxu0 %v106
    %1073 = vmatpush.msra.mxu0 %v102
    %1074 = vmatpush.msra.mxu0 %v98
    %1075 = vmatpush.msra.mxu0 %v94
    %1076 = vmatpush.msra.mxu0 %v90
    %1077 = vmatpush.msra.mxu0 %v86
    %1078 = vmatpush.msra.mxu0 %v82
    %1079 = vmatpush.msra.mxu0 %v78
    %1080 = vmatpush.msra.mxu0 %v74
    %1081 = vmatpush.msra.mxu0 %v70
    %1082 = vmatpush.msra.mxu0 %v66
    %1083 = vmatpush.msra.mxu0 %v62
    %1084 = vmatpush.msra.mxu0 %v58
    %1085 = vmatmul.f32.gmra.mxu0 %v1067
    %v1086 = vpop.f32.mrf.mxu0
    %v1087 = vadd.f32 0.0, %v1086
    %1088 = vdwg.mxu0
    %1089 = vmatpush.msra.mxu0 %v119
    %1090 = vmatpush.msra.mxu0 %v115
    %1091 = vmatpush.msra.mxu0 %v111
    %1092 = vmatpush.msra.mxu0 %v107
    %1093 = vmatpush.msra.mxu0 %v103
    %1094 = vmatpush.msra.mxu0 %v99
    %1095 = vmatpush.msra.mxu0 %v95
    %1096 = vmatpush.msra.mxu0 %v91
    %1097 = vmatpush.msra.mxu0 %v87
    %1098 = vmatpush.msra.mxu0 %v83
    %1099 = vmatpush.msra.mxu0 %v79
    %1100 = vmatpush.msra.mxu0 %v75
    %1101 = vmatpush.msra.mxu0 %v71
    %1102 = vmatpush.msra.mxu0 %v67
    %1103 = vmatpush.msra.mxu0 %v63
    %1104 = vmatpush.msra.mxu0 %v59
    %1105 = vmatmul.f32.gmra.mxu0 %v1067
    %v1106 = vpop.f32.mrf.mxu0
    %v1107 = vadd.f32 0.0, %v1106
    %1108 = vdwg.mxu0
    %1109 = vmatpush.msra.mxu0 %v120
    %1110 = vmatpush.msra.mxu0 %v116
    %1111 = vmatpush.msra.mxu0 %v112
    %1112 = vmatpush.msra.mxu0 %v108
    %1113 = vmatpush.msra.mxu0 %v104
    %1114 = vmatpush.msra.mxu0 %v100
    %1115 = vmatpush.msra.mxu0 %v96
    %1116 = vmatpush.msra.mxu0 %v92
    %1117 = vmatpush.msra.mxu0 %v88
    %1118 = vmatpush.msra.mxu0 %v84
    %1119 = vmatpush.msra.mxu0 %v80
    %1120 = vmatpush.msra.mxu0 %v76
    %1121 = vmatpush.msra.mxu0 %v72
    %1122 = vmatpush.msra.mxu0 %v68
    %1123 = vmatpush.msra.mxu0 %v64
    %1124 = vmatpush.msra.mxu0 %v60
    %1125 = vmatmul.f32.gmra.mxu0 %v1067
    %v1126 = vpop.f32.mrf.mxu0
    %v1127 = vadd.f32 0.0, %v1126
    %1128 = vdwg.mxu0
    %1129 = vmatpush.msra.mxu0 %v121
    %1130 = vmatpush.msra.mxu0 %v117
    %1131 = vmatpush.msra.mxu0 %v113
    %1132 = vmatpush.msra.mxu0 %v109
    %1133 = vmatpush.msra.mxu0 %v105
    %1134 = vmatpush.msra.mxu0 %v101
    %1135 = vmatpush.msra.mxu0 %v97
    %1136 = vmatpush.msra.mxu0 %v93
    %1137 = vmatpush.msra.mxu0 %v89
    %1138 = vmatpush.msra.mxu0 %v85
    %1139 = vmatpush.msra.mxu0 %v81
    %1140 = vmatpush.msra.mxu0 %v77
    %1141 = vmatpush.msra.mxu0 %v73
    %1142 = vmatpush.msra.mxu0 %v69
    %1143 = vmatpush.msra.mxu0 %v65
    %1144 = vmatpush.msra.mxu0 %v61
    %1145 = vmatmul.f32.gmra.mxu0 %v1067
    %v1146 = vpop.f32.mrf.mxu0
    %v1147 = vadd.f32 0.0, %v1146
    %1148 = vdwg.mxu0
    %v1149 = vadd.f32 %v209, %v1087
    %v1150 = vadd.f32 %v253, %v1107
    %v1151 = vadd.f32 %v297, %v1127
    %v1152 = vadd.f32 %v341, %v1147
    %v1153 = vmul.f32 %v1149, 0.5
    %v1154 = vmul.f32 %v1150, 0.5
    %v1155 = vmul.f32 %v1151, 0.5
    %v1156 = vtanh.pop %v1153
    %v1157 = vtanh.pop %v1154
    %v1158 = vtanh.pop %v1155
    %v1159 = vmul.f32 %v1156, 0.5
    %v1160 = vmul.f32 %v1157, 0.5
    %v1161 = vmul.f32 %v1158, 0.5
    %v1162 = vadd.f32 %v1159, 0.5
    %v1163 = vadd.f32 %v1160, 0.5
    %v1164 = vadd.f32 %v1161, 0.5
    %v1165 = vtanh.pop %v1152
    %v1166 = vmul.f32 %v1163, %v1065
    %v1167 = vmul.f32 %v1162, %v1165
    %v1168 = vadd.f32 %v1166, %v1167
    %v1169 = vtanh.pop %v1168
    %v1170 = vmul.f32 %v1164, %v1169
    %1171 = vst [vmem:[#allocation2 + $0x30] sm:$0xff] %v1170
    %1172 = vmatpush.msra.mxu0 %v118
    %1173 = vmatpush.msra.mxu0 %v114
    %1174 = vmatpush.msra.mxu0 %v110
    %1175 = vmatpush.msra.mxu0 %v106
    %1176 = vmatpush.msra.mxu0 %v102
    %1177 = vmatpush.msra.mxu0 %v98
    %1178 = vmatpush.msra.mxu0 %v94
    %1179 = vmatpush.msra.mxu0 %v90
    %1180 = vmatpush.msra.mxu0 %v86
    %1181 = vmatpush.msra.mxu0 %v82
    %1182 = vmatpush.msra.mxu0 %v78
    %1183 = vmatpush.msra.mxu0 %v74
    %1184 = vmatpush.msra.mxu0 %v70
    %1185 = vmatpush.msra.mxu0 %v66
    %1186 = vmatpush.msra.mxu0 %v62
    %1187 = vmatpush.msra.mxu0 %v58
    %1188 = vmatmul.f32.gmra.mxu0 %v1170
    %v1189 = vpop.f32.mrf.mxu0
    %v1190 = vadd.f32 0.0, %v1189
    %1191 = vdwg.mxu0
    %1192 = vmatpush.msra.mxu0 %v119
    %1193 = vmatpush.msra.mxu0 %v115
    %1194 = vmatpush.msra.mxu0 %v111
    %1195 = vmatpush.msra.mxu0 %v107
    %1196 = vmatpush.msra.mxu0 %v103
    %1197 = vmatpush.msra.mxu0 %v99
    %1198 = vmatpush.msra.mxu0 %v95
    %1199 = vmatpush.msra.mxu0 %v91
    %1200 = vmatpush.msra.mxu0 %v87
    %1201 = vmatpush.msra.mxu0 %v83
    %1202 = vmatpush.msra.mxu0 %v79
    %1203 = vmatpush.msra.mxu0 %v75
    %1204 = vmatpush.msra.mxu0 %v71
    %1205 = vmatpush.msra.mxu0 %v67
    %1206 = vmatpush.msra.mxu0 %v63
    %1207 = vmatpush.msra.mxu0 %v59
    %1208 = vmatmul.f32.gmra.mxu0 %v1170
    %v1209 = vpop.f32.mrf.mxu0
    %v1210 = vadd.f32 0.0, %v1209
    %1211 = vdwg.mxu0
    %1212 = vmatpush.msra.mxu0 %v120
    %1213 = vmatpush.msra.mxu0 %v116
    %1214 = vmatpush.msra.mxu0 %v112
    %1215 = vmatpush.msra.mxu0 %v108
    %1216 = vmatpush.msra.mxu0 %v104
    %1217 = vmatpush.msra.mxu0 %v100
    %1218 = vmatpush.msra.mxu0 %v96
    %1219 = vmatpush.msra.mxu0 %v92
    %1220 = vmatpush.msra.mxu0 %v88
    %1221 = vmatpush.msra.mxu0 %v84
    %1222 = vmatpush.msra.mxu0 %v80
    %1223 = vmatpush.msra.mxu0 %v76
    %1224 = vmatpush.msra.mxu0 %v72
    %1225 = vmatpush.msra.mxu0 %v68
    %1226 = vmatpush.msra.mxu0 %v64
    %1227 = vmatpush.msra.mxu0 %v60
    %1228 = vmatmul.f32.gmra.mxu0 %v1170
    %v1229 = vpop.f32.mrf.mxu0
    %v1230 = vadd.f32 0.0, %v1229
    %1231 = vdwg.mxu0
    %1232 = vmatpush.msra.mxu0 %v121
    %1233 = vmatpush.msra.mxu0 %v117
    %1234 = vmatpush.msra.mxu0 %v113
    %1235 = vmatpush.msra.mxu0 %v109
    %1236 = vmatpush.msra.mxu0 %v105
    %1237 = vmatpush.msra.mxu0 %v101
    %1238 = vmatpush.msra.mxu0 %v97
    %1239 = vmatpush.msra.mxu0 %v93
    %1240 = vmatpush.msra.mxu0 %v89
    %1241 = vmatpush.msra.mxu0 %v85
    %1242 = vmatpush.msra.mxu0 %v81
    %1243 = vmatpush.msra.mxu0 %v77
    %1244 = vmatpush.msra.mxu0 %v73
    %1245 = vmatpush.msra.mxu0 %v69
    %1246 = vmatpush.msra.mxu0 %v65
    %1247 = vmatpush.msra.mxu0 %v61
    %1248 = vmatmul.f32.gmra.mxu0 %v1170
    %v1249 = vpop.f32.mrf.mxu0
    %v1250 = vadd.f32 0.0, %v1249
    %1251 = vdwg.mxu0
    %v1252 = vadd.f32 %v212, %v1190
    %v1253 = vadd.f32 %v256, %v1210
    %v1254 = vadd.f32 %v300, %v1230
    %v1255 = vadd.f32 %v344, %v1250
    %v1256 = vmul.f32 %v1252, 0.5
    %v1257 = vmul.f32 %v1253, 0.5
    %v1258 = vmul.f32 %v1254, 0.5
    %v1259 = vtanh.pop %v1256
    %v1260 = vtanh.pop %v1257
    %v1261 = vtanh.pop %v1258
    %v1262 = vmul.f32 %v1259, 0.5
    %v1263 = vmul.f32 %v1260, 0.5
    %v1264 = vmul.f32 %v1261, 0.5
    %v1265 = vadd.f32 %v1262, 0.5
    %v1266 = vadd.f32 %v1263, 0.5
    %v1267 = vadd.f32 %v1264, 0.5
    %v1268 = vtanh.pop %v1255
    %v1269 = vmul.f32 %v1266, %v1168
    %v1270 = vmul.f32 %v1265, %v1268
    %v1271 = vadd.f32 %v1269, %v1270
    %v1272 = vtanh.pop %v1271
    %v1273 = vmul.f32 %v1267, %v1272
    %1274 = vst [vmem:[#allocation2 + $0x38] sm:$0xff] %v1273
    %v1275 = vld [vmem:[#allocation6] sm:$0xff]
    %v1276 = vld [vmem:[#allocation6 + $0x8] sm:$0xff]
    %v1277 = vld [vmem:[#allocation6 + $0x10] sm:$0xff]
    %v1278 = vld [vmem:[#allocation6 + $0x18] sm:$0xff]
    %v1279 = vld [vmem:[#allocation6 + $0x20] sm:$0xff]
    %v1280 = vld [vmem:[#allocation6 + $0x28] sm:$0xff]
    %v1281 = vld [vmem:[#allocation6 + $0x30] sm:$0xff]
    %v1282 = vld [vmem:[#allocation6 + $0x38] sm:$0xff]
    %v1283 = vld [vmem:[#allocation6 + $0x40] sm:$0xff]
    %v1284 = vld [vmem:[#allocation6 + $0x48] sm:$0xff]
    %v1285 = vld [vmem:[#allocation6 + $0x50] sm:$0xff]
    %v1286 = vld [vmem:[#allocation6 + $0x58] sm:$0xff]
    %v1287 = vld [vmem:[#allocation6 + $0x60] sm:$0xff]
    %v1288 = vld [vmem:[#allocation6 + $0x68] sm:$0xff]
    %v1289 = vld [vmem:[#allocation6 + $0x70] sm:$0xff]
    %v1290 = vld [vmem:[#allocation6 + $0x78] sm:$0xff]
    %v1291 = vld [vmem:[#allocation6 + $0x80] sm:$0x1]
    %v1292 = vld [vmem:[#allocation2] sm:$0xff]
    %v1293 = vld [vmem:[#allocation2 + $0x8] sm:$0xff]
    %v1294 = vld [vmem:[#allocation2 + $0x10] sm:$0xff]
    %v1295 = vld [vmem:[#allocation2 + $0x18] sm:$0xff]
    %v1296 = vld [vmem:[#allocation2 + $0x20] sm:$0xff]
    %v1297 = vld [vmem:[#allocation2 + $0x28] sm:$0xff]
    %v1298 = vld [vmem:[#allocation2 + $0x30] sm:$0xff]
    %v1299 = vld [vmem:[#allocation2 + $0x38] sm:$0xff]
    %v1300 = vperm.slane %v1291, 0
    %1301 = vmatpush.msra.mxu0 %v1290
    %1302 = vmatpush.msra.mxu0 %v1289
    %1303 = vmatpush.msra.mxu0 %v1288
    %1304 = vmatpush.msra.mxu0 %v1287
    %1305 = vmatpush.msra.mxu0 %v1286
    %1306 = vmatpush.msra.mxu0 %v1285
    %1307 = vmatpush.msra.mxu0 %v1284
    %1308 = vmatpush.msra.mxu0 %v1283
    %1309 = vmatpush.msra.mxu0 %v1282
    %1310 = vmatpush.msra.mxu0 %v1281
    %1311 = vmatpush.msra.mxu0 %v1280
    %1312 = vmatpush.msra.mxu0 %v1279
    %1313 = vmatpush.msra.mxu0 %v1278
    %1314 = vmatpush.msra.mxu0 %v1277
    %1315 = vmatpush.msra.mxu0 %v1276
    %1316 = vmatpush.msra.mxu0 %v1275
    %1317 = vmatmul.f32.gmra.mxu0 %v1292
    %v1318 = vpop.f32.mrf.mxu0
    %v1319 = vadd.f32 %v1300, %v1318
    %1320 = vmatmul.f32.gmra.mxu0 %v1293
    %v1321 = vpop.f32.mrf.mxu0
    %v1322 = vadd.f32 %v1300, %v1321
    %1323 = vmatmul.f32.gmra.mxu0 %v1294
    %v1324 = vpop.f32.mrf.mxu0
    %v1325 = vadd.f32 %v1300, %v1324
    %1326 = vmatmul.f32.gmra.mxu0 %v1295
    %v1327 = vpop.f32.mrf.mxu0
    %v1328 = vadd.f32 %v1300, %v1327
    %1329 = vmatmul.f32.gmra.mxu0 %v1296
    %v1330 = vpop.f32.mrf.mxu0
    %v1331 = vadd.f32 %v1300, %v1330
    %1332 = vmatmul.f32.gmra.mxu0 %v1297
    %v1333 = vpop.f32.mrf.mxu0
    %v1334 = vadd.f32 %v1300, %v1333
    %1335 = vmatmul.f32.gmra.mxu0 %v1298
    %v1336 = vpop.f32.mrf.mxu0
    %v1337 = vadd.f32 %v1300, %v1336
    %1338 = vmatmul.f32.gmra.mxu0 %v1299
    %v1339 = vpop.f32.mrf.mxu0
    %v1340 = vadd.f32 %v1300, %v1339
    %1341 = vdwg.mxu0
    %v1342 = vld [vmem:[%s3] sm:$0xff]
    %v1343 = vld [vmem:[%s3 + $0x8] sm:$0xff]
    %v1344 = vld [vmem:[%s3 + $0x10] sm:$0xff]
    %v1345 = vld [vmem:[%s3 + $0x18] sm:$0xff]
    %v1346 = vld [vmem:[%s3 + $0x20] sm:$0xff]
    %v1347 = vld [vmem:[%s3 + $0x28] sm:$0xff]
    %v1348 = vld [vmem:[%s3 + $0x30] sm:$0xff]
    %v1349 = vld [vmem:[%s3 + $0x38] sm:$0xff]
    %v1350 = vmax.f32 %v1319, 0.0
    %v1351 = vmax.f32 %v1322, 0.0
    %v1352 = vmax.f32 %v1325, 0.0
    %v1353 = vmax.f32 %v1328, 0.0
    %v1354 = vmax.f32 %v1331, 0.0
    %v1355 = vmax.f32 %v1334, 0.0
    %v1356 = vmax.f32 %v1337, 0.0
    %v1357 = vmax.f32 %v1340, 0.0
    %v1358 = vand.u32 2147483647, %v1319
    %v1359 = vand.u32 2147483647, %v1322
    %v1360 = vand.u32 2147483647, %v1325
    %v1361 = vand.u32 2147483647, %v1328
    %v1362 = vand.u32 2147483647, %v1331
    %v1363 = vand.u32 2147483647, %v1334
    %v1364 = vand.u32 2147483647, %v1337
    %v1365 = vand.u32 2147483647, %v1340
    %v1366 = vsub.f32 0.0, %v1358
    %v1367 = vsub.f32 0.0, %v1359
    %v1368 = vsub.f32 0.0, %v1360
    %v1369 = vsub.f32 0.0, %v1361
    %v1370 = vsub.f32 0.0, %v1362
    %v1371 = vsub.f32 0.0, %v1363
    %v1372 = vsub.f32 0.0, %v1364
    %v1373 = vsub.f32 0.0, %v1365
    %v1374 = vmul.f32 %v1366, 1.442695
    %v1375 = vpow.pop %v1374
    %v1376 = vmul.f32 %v1367, 1.442695
    %v1377 = vpow.pop %v1376
    %v1378 = vmul.f32 %v1368, 1.442695
    %v1379 = vpow.pop %v1378
    %v1380 = vmul.f32 %v1369, 1.442695
    %v1381 = vpow.pop %v1380
    %v1382 = vmul.f32 %v1370, 1.442695
    %v1383 = vpow.pop %v1382
    %v1384 = vmul.f32 %v1371, 1.442695
    %v1385 = vpow.pop %v1384
    %v1386 = vmul.f32 %v1372, 1.442695
    %v1387 = vpow.pop %v1386
    %v1388 = vmul.f32 %v1373, 1.442695
    %v1389 = vpow.pop %v1388
    %v1390 = vadd.f32 %v1375, 1.0
    %v1391 = vadd.f32 %v1377, 1.0
    %v1392 = vadd.f32 %v1379, 1.0
    %v1393 = vadd.f32 %v1381, 1.0
    %v1394 = vadd.f32 %v1383, 1.0
    %v1395 = vadd.f32 %v1385, 1.0
    %v1396 = vadd.f32 %v1387, 1.0
    %v1397 = vadd.f32 %v1389, 1.0
    %v1398 = vlog2.pop %v1390
    %v1399 = vmul.f32 %v1398, 0.6931472
    %v1400 = vlog2.pop %v1391
    %v1401 = vmul.f32 %v1400, 0.6931472
    %v1402 = vlog2.pop %v1392
    %v1403 = vmul.f32 %v1402, 0.6931472
    %v1404 = vlog2.pop %v1393
    %v1405 = vmul.f32 %v1404, 0.6931472
    %v1406 = vlog2.pop %v1394
    %v1407 = vmul.f32 %v1406, 0.6931472
    %v1408 = vlog2.pop %v1395
    %v1409 = vmul.f32 %v1408, 0.6931472
    %v1410 = vlog2.pop %v1396
    %v1411 = vmul.f32 %v1410, 0.6931472
    %v1412 = vlog2.pop %v1397
    %v1413 = vmul.f32 %v1412, 0.6931472
    %v1414 = vadd.f32 %v1350, %v1399
    %v1415 = vadd.f32 %v1351, %v1401
    %v1416 = vadd.f32 %v1352, %v1403
    %v1417 = vadd.f32 %v1353, %v1405
    %v1418 = vadd.f32 %v1354, %v1407
    %v1419 = vadd.f32 %v1355, %v1409
    %v1420 = vadd.f32 %v1356, %v1411
    %v1421 = vadd.f32 %v1357, %v1413
    %1430 = vrot.lane.b32.xlu0 %v1342, 97
    %v1431 = vpop.permute.xlu0 %1430
    %1432 = vrot.lane.b32.xlu0 %v1343, 97
    %v1433 = vpop.permute.xlu0 %1432
    %1434 = vrot.lane.b32.xlu0 %v1344, 97
    %v1435 = vpop.permute.xlu0 %1434
    %1436 = vrot.lane.b32.xlu0 %v1345, 97
    %v1437 = vpop.permute.xlu0 %1436
    %1438 = vrot.lane.b32.xlu0 %v1346, 97
    %v1439 = vpop.permute.xlu0 %1438
    %1440 = vrot.lane.b32.xlu0 %v1347, 97
    %v1441 = vpop.permute.xlu0 %1440
    %1442 = vrot.lane.b32.xlu0 %v1348, 97
    %v1443 = vpop.permute.xlu0 %1442
    %1444 = vrot.lane.b32.xlu0 %v1349, 97
    %v1445 = vpop.permute.xlu0 %1444
    %v1454 = vmul.f32 %v1414, %v1431
    %v1455 = vmul.f32 %v1415, %v1433
    %v1456 = vmul.f32 %v1416, %v1435
    %v1457 = vmul.f32 %v1417, %v1437
    %v1458 = vmul.f32 %v1418, %v1439
    %v1459 = vmul.f32 %v1419, %v1441
    %v1460 = vmul.f32 %v1420, %v1443
    %v1461 = vmul.f32 %v1421, %v1445
    %1470 = vrot.lane.b32.xlu0 %v1454, 127
    %v1471 = vpop.permute.xlu0 %1470
    %1472 = vrot.lane.b32.xlu0 %v1455, 127
    %v1473 = vpop.permute.xlu0 %1472
    %1474 = vrot.lane.b32.xlu0 %v1456, 127
    %v1475 = vpop.permute.xlu0 %1474
    %1476 = vrot.lane.b32.xlu0 %v1457, 127
    %v1477 = vpop.permute.xlu0 %1476
    %1478 = vrot.lane.b32.xlu0 %v1458, 127
    %v1479 = vpop.permute.xlu0 %1478
    %1480 = vrot.lane.b32.xlu0 %v1459, 127
    %v1481 = vpop.permute.xlu0 %1480
    %1482 = vrot.lane.b32.xlu0 %v1460, 127
    %v1483 = vpop.permute.xlu0 %1482
    %1484 = vrot.lane.b32.xlu0 %v1461, 127
    %v1485 = vpop.permute.xlu0 %1484
    %v1494 = vadd.f32 %v1319, %v1471
    %v1495 = vadd.f32 %v1322, %v1473
    %v1496 = vadd.f32 %v1325, %v1475
    %v1497 = vadd.f32 %v1328, %v1477
    %v1498 = vadd.f32 %v1331, %v1479
    %v1499 = vadd.f32 %v1334, %v1481
    %v1500 = vadd.f32 %v1337, %v1483
    %v1501 = vadd.f32 %v1340, %v1485
    %1502 = vrot.lane.b32.xlu0 %v1342, 64
    %v1503 = vpop.permute.xlu0 %1502
    %1504 = vrot.lane.b32.xlu0 %v1343, 64
    %v1505 = vpop.permute.xlu0 %1504
    %1506 = vrot.lane.b32.xlu0 %v1344, 64
    %v1507 = vpop.permute.xlu0 %1506
    %1508 = vrot.lane.b32.xlu0 %v1345, 64
    %v1509 = vpop.permute.xlu0 %1508
    %1510 = vrot.lane.b32.xlu0 %v1346, 64
    %v1511 = vpop.permute.xlu0 %1510
    %1512 = vrot.lane.b32.xlu0 %v1347, 64
    %v1513 = vpop.permute.xlu0 %1512
    %1514 = vrot.lane.b32.xlu0 %v1348, 64
    %v1515 = vpop.permute.xlu0 %1514
    %1516 = vrot.lane.b32.xlu0 %v1349, 64
    %v1517 = vpop.permute.xlu0 %1516
    %v1526 = vmul.f32 %v1414, %v1503
    %v1527 = vmul.f32 %v1415, %v1505
    %v1528 = vmul.f32 %v1416, %v1507
    %v1529 = vmul.f32 %v1417, %v1509
    %v1530 = vmul.f32 %v1418, %v1511
    %v1531 = vmul.f32 %v1419, %v1513
    %v1532 = vmul.f32 %v1420, %v1515
    %v1533 = vmul.f32 %v1421, %v1517
    %1542 = vrot.lane.b32.xlu0 %v1526, 96
    %v1543 = vpop.permute.xlu0 %1542
    %1544 = vrot.lane.b32.xlu0 %v1527, 96
    %v1545 = vpop.permute.xlu0 %1544
    %1546 = vrot.lane.b32.xlu0 %v1528, 96
    %v1547 = vpop.permute.xlu0 %1546
    %1548 = vrot.lane.b32.xlu0 %v1529, 96
    %v1549 = vpop.permute.xlu0 %1548
    %1550 = vrot.lane.b32.xlu0 %v1530, 96
    %v1551 = vpop.permute.xlu0 %1550
    %1552 = vrot.lane.b32.xlu0 %v1531, 96
    %v1553 = vpop.permute.xlu0 %1552
    %1554 = vrot.lane.b32.xlu0 %v1532, 96
    %v1555 = vpop.permute.xlu0 %1554
    %1556 = vrot.lane.b32.xlu0 %v1533, 96
    %v1557 = vpop.permute.xlu0 %1556
    %v1566 = vadd.f32 %v1319, %v1543
    %v1567 = vadd.f32 %v1322, %v1545
    %v1568 = vadd.f32 %v1325, %v1547
    %v1569 = vadd.f32 %v1328, %v1549
    %v1570 = vadd.f32 %v1331, %v1551
    %v1571 = vadd.f32 %v1334, %v1553
    %v1572 = vadd.f32 %v1337, %v1555
    %v1573 = vadd.f32 %v1340, %v1557
    %v1574 = vtanh.pop %v1566
    %v1575 = vtanh.pop %v1567
    %v1576 = vtanh.pop %v1568
    %v1577 = vtanh.pop %v1569
    %v1578 = vtanh.pop %v1570
    %v1579 = vtanh.pop %v1571
    %v1580 = vtanh.pop %v1572
    %v1581 = vtanh.pop %v1573
    %vm1582 = vcmask 7168
    %v1583 = vsel %vm1582, %v1494, -inf
    %v1584 = vsel %vm1582, %v1495, -inf
    %v1585 = vsel %vm1582, %v1496, -inf
    %v1586 = vsel %vm1582, %v1497, -inf
    %v1587 = vsel %vm1582, %v1498, -inf
    %v1588 = vmax.f32 %v1583, %v1587
    %v1589 = vsel %vm1582, %v1499, -inf
    %v1590 = vmax.f32 %v1584, %v1589
    %v1591 = vsel %vm1582, %v1500, -inf
    %v1592 = vmax.f32 %v1585, %v1591
    %v1593 = vsel %vm1582, %v1501, -inf
    %v1594 = vmax.f32 %v1586, %v1593
    %v1595 = vmax.f32 %v1588, %v1590
    %v1596 = vmax.f32 %v1592, %v1594
    %v1597 = vmax.f32 %v1595, %v1596
    %v1598 = vrot.slane %v1597, 4
    %v1599 = vmax.f32 %v1597, %v1598
    %v1600 = vrot.slane %v1599, 2
    %v1601 = vmax.f32 %v1599, %v1600
    %v1602 = vrot.slane %v1601, 1
    %v1603 = vmax.f32 %v1601, %v1602
    %v1604 = vsub.f32 %v1494, %v1603
    %v1605 = vsub.f32 %v1495, %v1603
    %v1606 = vsub.f32 %v1496, %v1603
    %v1607 = vsub.f32 %v1497, %v1603
    %v1608 = vsub.f32 %v1498, %v1603
    %v1609 = vsub.f32 %v1499, %v1603
    %v1610 = vsub.f32 %v1500, %v1603
    %v1611 = vsub.f32 %v1501, %v1603
    %v1612 = vmul.f32 %v1604, 1.442695
    %v1613 = vpow.pop %v1612
    %v1614 = vmul.f32 %v1605, 1.442695
    %v1615 = vpow.pop %v1614
    %v1616 = vmul.f32 %v1606, 1.442695
    %v1617 = vpow.pop %v1616
    %v1618 = vmul.f32 %v1607, 1.442695
    %v1619 = vpow.pop %v1618
    %v1620 = vmul.f32 %v1608, 1.442695
    %v1621 = vpow.pop %v1620
    %v1622 = vmul.f32 %v1609, 1.442695
    %v1623 = vpow.pop %v1622
    %v1624 = vmul.f32 %v1610, 1.442695
    %v1625 = vpow.pop %v1624
    %v1626 = vmul.f32 %v1611, 1.442695
    %v1627 = vpow.pop %v1626
    %v1628 = vld [vmem:[#allocation6 + $0x88] sm:$0xff]
    %v1629 = vld [vmem:[#allocation6 + $0x90] sm:$0xff]
    %v1630 = vld [vmem:[%s0] sm:$0xff]
    %v1631 = vld [vmem:[%s0 + $0x8] sm:$0xff]
    %v1632 = vld [vmem:[%s0 + $0x10] sm:$0xff]
    %v1633 = vld [vmem:[%s0 + $0x18] sm:$0xff]
    %v1634 = vld [vmem:[%s0 + $0x20] sm:$0xff]
    %v1635 = vld [vmem:[%s0 + $0x28] sm:$0xff]
    %v1636 = vld [vmem:[%s0 + $0x30] sm:$0xff]
    %v1637 = vld [vmem:[%s0 + $0x38] sm:$0xff]
    %v1639 = vsel %vm142, %v1630, 0
    %v1642 = vsel %vm142, %v1631, 0
    %v1645 = vsel %vm142, %v1632, 0
    %v1648 = vsel %vm142, %v1633, 0
    %v1651 = vsel %vm142, %v1634, 0
    %v1654 = vsel %vm142, %v1635, 0
    %v1657 = vsel %vm142, %v1636, 0
    %v1660 = vsel %vm142, %v1637, 0
    %1662 = vmatpush.msra.mxu0 0.0
    %1663 = vmatpush.msra.mxu0 0.0
    %1664 = vmatpush.msra.mxu0 0.0
    %1665 = vmatpush.msra.mxu0 0.0
    %1666 = vmatpush.msra.mxu0 0.0
    %1667 = vmatpush.msra.mxu0 0.0
    %1668 = vmatpush.msra.mxu0 0.0
    %1669 = vmatpush.msra.mxu0 0.0
    %1670 = vmatpush.msra.mxu0 0.0
    %1671 = vmatpush.msra.mxu0 0.0
    %1672 = vmatpush.msra.mxu0 0.0
    %1673 = vmatpush.msra.mxu0 0.0
    %1674 = vmatpush.msra.mxu0 0.0
    %1675 = vmatpush.msra.mxu0 0.0
    %1676 = vmatpush.msra.mxu0 %v1629
    %1677 = vmatpush.msra.mxu0 %v1628
    %1678 = vmatmul.f32.gmra.mxu0 %v1639
    %v1679 = vpop.f32.mrf.mxu0
    %v1680 = vadd.f32 0.0, %v1679
    %1681 = vmatmul.f32.gmra.mxu0 %v1642
    %v1682 = vpop.f32.mrf.mxu0
    %v1683 = vadd.f32 0.0, %v1682
    %1684 = vmatmul.f32.gmra.mxu0 %v1645
    %v1685 = vpop.f32.mrf.mxu0
    %v1686 = vadd.f32 0.0, %v1685
    %1687 = vmatmul.f32.gmra.mxu0 %v1648
    %v1688 = vpop.f32.mrf.mxu0
    %v1689 = vadd.f32 0.0, %v1688
    %1690 = vmatmul.f32.gmra.mxu0 %v1651
    %v1691 = vpop.f32.mrf.mxu0
    %v1692 = vadd.f32 0.0, %v1691
    %1693 = vmatmul.f32.gmra.mxu0 %v1654
    %v1694 = vpop.f32.mrf.mxu0
    %v1695 = vadd.f32 0.0, %v1694
    %1696 = vmatmul.f32.gmra.mxu0 %v1657
    %v1697 = vpop.f32.mrf.mxu0
    %v1698 = vadd.f32 0.0, %v1697
    %1699 = vmatmul.f32.gmra.mxu0 %v1660
    %v1700 = vpop.f32.mrf.mxu0
    %v1701 = vadd.f32 0.0, %v1700
    %1702 = vdwg.mxu0
    %1704 = vset.pattern.permute.xlu0 0
    %1705 = vperm.xlu0 %1704, %v1613
    %v1706 = vpop.permute.xlu0 %1705
    %1709 = vset.pattern.permute.xlu0 0
    %1710 = vperm.xlu0 %1709, %v1615
    %v1711 = vpop.permute.xlu0 %1710
    %1714 = vset.pattern.permute.xlu0 0
    %1715 = vperm.xlu0 %1714, %v1617
    %v1716 = vpop.permute.xlu0 %1715
    %1719 = vset.pattern.permute.xlu0 0
    %1720 = vperm.xlu0 %1719, %v1619
    %v1721 = vpop.permute.xlu0 %1720
    %1724 = vset.pattern.permute.xlu0 0
    %1725 = vperm.xlu0 %1724, %v1621
    %v1726 = vpop.permute.xlu0 %1725
    %1729 = vset.pattern.permute.xlu0 0
    %1730 = vperm.xlu0 %1729, %v1623
    %v1731 = vpop.permute.xlu0 %1730
    %1734 = vset.pattern.permute.xlu0 0
    %1735 = vperm.xlu0 %1734, %v1625
    %v1736 = vpop.permute.xlu0 %1735
    %1739 = vset.pattern.permute.xlu0 0
    %1740 = vperm.xlu0 %1739, %v1627
    %v1741 = vpop.permute.xlu0 %1740
    %v1743 = vmul.f32 %v1706, %v1680
    %v1744 = vmul.f32 %v1711, %v1683
    %v1745 = vmul.f32 %v1716, %v1686
    %v1746 = vmul.f32 %v1721, %v1689
    %v1747 = vmul.f32 %v1726, %v1692
    %v1748 = vmul.f32 %v1731, %v1695
    %v1749 = vmul.f32 %v1736, %v1698
    %v1750 = vmul.f32 %v1741, %v1701
    %1759 = vrot.lane.b32.xlu0 %v1574, 96
    %v1760 = vpop.permute.xlu0 %1759
    %1761 = vrot.lane.b32.xlu0 %v1575, 96
    %v1762 = vpop.permute.xlu0 %1761
    %1763 = vrot.lane.b32.xlu0 %v1576, 96
    %v1764 = vpop.permute.xlu0 %1763
    %1765 = vrot.lane.b32.xlu0 %v1577, 96
    %v1766 = vpop.permute.xlu0 %1765
    %1767 = vrot.lane.b32.xlu0 %v1578, 96
    %v1768 = vpop.permute.xlu0 %1767
    %1769 = vrot.lane.b32.xlu0 %v1579, 96
    %v1770 = vpop.permute.xlu0 %1769
    %1771 = vrot.lane.b32.xlu0 %v1580, 96
    %v1772 = vpop.permute.xlu0 %1771
    %1773 = vrot.lane.b32.xlu0 %v1581, 96
    %v1774 = vpop.permute.xlu0 %1773
    %v1783 = vmul.f32 %v1743, %v1760
    %v1784 = vmul.f32 %v1744, %v1762
    %v1785 = vmul.f32 %v1745, %v1764
    %v1786 = vmul.f32 %v1746, %v1766
    %v1787 = vmul.f32 %v1747, %v1768
    %v1788 = vmul.f32 %v1748, %v1770
    %v1789 = vmul.f32 %v1749, %v1772
    %v1790 = vmul.f32 %v1750, %v1774
    %v1791 = vld [vmem:[#allocation6 + $0xc0] sm:$0xff]
    %1792 = vrot.lane.b32.xlu0 %v1613, 32
    %v1793 = vpop.permute.xlu0 %1792
    %1794 = vrot.lane.b32.xlu0 %v1615, 32
    %v1795 = vpop.permute.xlu0 %1794
    %1796 = vrot.lane.b32.xlu0 %v1617, 32
    %v1797 = vpop.permute.xlu0 %1796
    %1798 = vrot.lane.b32.xlu0 %v1619, 32
    %v1799 = vpop.permute.xlu0 %1798
    %1800 = vrot.lane.b32.xlu0 %v1621, 32
    %v1801 = vpop.permute.xlu0 %1800
    %1802 = vrot.lane.b32.xlu0 %v1623, 32
    %v1803 = vpop.permute.xlu0 %1802
    %1804 = vrot.lane.b32.xlu0 %v1625, 32
    %v1805 = vpop.permute.xlu0 %1804
    %1806 = vrot.lane.b32.xlu0 %v1627, 32
    %v1807 = vpop.permute.xlu0 %1806
    %vm1816 = vcmask 261120
    %v1817 = vsel %vm1816, %v1783, %v1793
    %v1818 = vsel %vm1816, %v1784, %v1795
    %v1819 = vsel %vm1816, %v1785, %v1797
    %v1820 = vsel %vm1816, %v1786, %v1799
    %v1821 = vsel %vm1816, %v1787, %v1801
    %v1822 = vsel %vm1816, %v1788, %v1803
    %v1823 = vsel %vm1816, %v1789, %v1805
    %v1824 = vsel %vm1816, %v1790, %v1807
    %vm1825 = vcmask 523264
    %v1827 = vsel %vm1825, %v1791, 0
    %1829 = vmatpush.msra.mxu0 0.0
    %1830 = vmatpush.msra.mxu0 0.0
    %1831 = vmatpush.msra.mxu0 0.0
    %1832 = vmatpush.msra.mxu0 0.0
    %1833 = vmatpush.msra.mxu0 0.0
    %1834 = vmatpush.msra.mxu0 0.0
    %1835 = vmatpush.msra.mxu0 0.0
    %1836 = vmatpush.msra.mxu0 0.0
    %1837 = vmatpush.msra.mxu0 %v1824
    %1838 = vmatpush.msra.mxu0 %v1823
    %1839 = vmatpush.msra.mxu0 %v1822
    %1840 = vmatpush.msra.mxu0 %v1821
    %1841 = vmatpush.msra.mxu0 %v1820
    %1842 = vmatpush.msra.mxu0 %v1819
    %1843 = vmatpush.msra.mxu0 %v1818
    %1844 = vmatpush.msra.mxu0 %v1817
    %1845 = vmatmul.f32.gmra.mxu0 %v1827
    %v1846 = vpop.f32.mrf.mxu0
    %v1847 = vadd.f32 0.0, %v1846
    %1848 = vdwg.mxu0
    %v1849 = vrcp.pop %v1847
    %1851 = vset.pattern.permute.xlu0 32
    %1852 = vperm.xlu0 %1851, %v1849
    %v1853 = vpop.permute.xlu0 %1852
    %v1855 = vmul.f32 %v1847, %v1853
    %v1856 = vld [vmem:[#allocation6 + $0x98] sm:$0xff]
    %v1857 = vld [vmem:[#allocation6 + $0xa0] sm:$0xff]
    %v1858 = vld [vmem:[#allocation6 + $0xa8] sm:$0xff]
    %v1859 = vld [vmem:[#allocation6 + $0xb0] sm:$0xff]
    %v1860 = vld [vmem:[#allocation6 + $0xb8] sm:$0x1]
    %v1861 = vperm.slane %v1860, 0
    %v1863 = vsel %vm1816, %v1855, 0
    %1865 = vmatpush.msra.mxu0 0.0
    %1866 = vmatpush.msra.mxu0 0.0
    %1867 = vmatpush.msra.mxu0 0.0
    %1868 = vmatpush.msra.mxu0 0.0
    %1869 = vmatpush.msra.mxu0 0.0
    %1870 = vmatpush.msra.mxu0 0.0
    %1871 = vmatpush.msra.mxu0 0.0
    %1872 = vmatpush.msra.mxu0 0.0
    %1873 = vmatpush.msra.mxu0 0.0
    %1874 = vmatpush.msra.mxu0 0.0
    %1875 = vmatpush.msra.mxu0 0.0
    %1876 = vmatpush.msra.mxu0 0.0
    %1877 = vmatpush.msra.mxu0 %v1859
    %1878 = vmatpush.msra.mxu0 %v1858
    %1879 = vmatpush.msra.mxu0 %v1857
    %1880 = vmatpush.msra.mxu0 %v1856
    %1881 = vmatmul.f32.gmra.mxu0 %v1863
    %v1882 = vpop.f32.mrf.mxu0
    %v1883 = vadd.f32 %v1861, %v1882
    %1884 = vdwg.mxu0
    %1885 = vst [vmem:[#allocation8] sm:$0xff] %v1883
    // Predicated region
    $region26: #{tpu_custom_call.1} parent=1 // pred_check
      _
    $region27: #{tpu_custom_call.1} parent=1 // pred_check_branch
      %1887 = sbr.rel (0) target = $region29
    $region28: #{tpu_custom_call.1} parent=1 // pred_region
      %1889 = vsyncadd [#allocation5], 0
      %s1891 = sshll.u32 [#allocation8], 4
      %s1892 = int_to_ptr.vmem [resolvable:$true] %s1891
      %s1893 = sshll.u32 %s4, 4
      %s1894 = int_to_ptr.hbm [resolvable:$true] %s1893
      %1896 = dma.vmem_to_hbm [thread:$0]  %s1892, 128, %s1894, [#allocation5]
    $region29: #{tpu_custom_call.1} parent=1 // pred_fallthru
      _
    // Predicated region
    $region30: #{tpu_custom_call.1} parent=1 // pred_check
      _
    $region31: #{tpu_custom_call.1} parent=1 // pred_check_branch
      %1898 = sbr.rel (0) target = $region33
    $region32: #{tpu_custom_call.1} parent=1 // pred_region
      %1900 = dma.done [#allocation5], 128
    $region33: #{tpu_custom_call.1} parent=1 // pred_fallthru
      _
    %1901 = vsyncpa [#allocation4], 1
    %1902 = vsyncpa [#allocation7], 1
    %1903 = vsyncpa [#allocation5], 1

</llo_original>
